<compile_context>
chip_gen: v7x
topology: tpu7x:2x2x1
jax: 0.10.0
libtpu: 0.0.40
codegen_flags: <defaults>
</compile_context>

<pallas_src>
from functools import partial

import jax
import jax.numpy as jnp
from jax.experimental import pallas as pl
from jax.experimental.pallas import tpu as pltpu


# ---------------------------------------------------------------------------
# Kernels: one (M-tile, N-tile) per grid step; N is the inner / "arbitrary"
# axis. At j==0 the fp32 residual and LayerNorm are computed once per M-tile
# and cached in a VMEM scratch; every j step feeds the MXU from that cache.
# ---------------------------------------------------------------------------
def _ln_two_pass(resid_f32, nw_ref, nb_ref, eps):
    mean = jnp.mean(resid_f32, axis=-1, keepdims=True)
    cent = resid_f32 - mean
    var = jnp.mean(cent * cent, axis=-1, keepdims=True)
    inv = jax.lax.rsqrt(var + eps)                                   # EUP
    return (cent * inv * nw_ref[...].astype(jnp.float32)
            + nb_ref[...].astype(jnp.float32))


def _mix(normed_scr, mw_ref, mb_ref, y_ref):
    # bf16 x bf16 on the MXU, f32 accumulation.
    y = jnp.dot(normed_scr[...].astype(mw_ref.dtype), mw_ref[...],
                preferred_element_type=jnp.float32)
    y_ref[...] = (y + mb_ref[...].astype(jnp.float32)).astype(y_ref.dtype)


def _fused_add_ln_mixer_kernel(h_ref, r_ref, nw_ref, nb_ref, mw_ref, mb_ref,
                               y_ref, res_ref, normed_scr, *, eps):
    @pl.when(pl.program_id(1) == 0)
    def _():
        # residual stays fp32 through the add (residual_in_fp32 semantics).
        resid = r_ref[...].astype(jnp.float32) + h_ref[...].astype(jnp.float32)
        normed_scr[...] = _ln_two_pass(resid, nw_ref, nb_ref, eps)
        res_ref[...] = resid
    _mix(normed_scr, mw_ref, mb_ref, y_ref)


def _fused_ln_mixer_kernel(h_ref, nw_ref, nb_ref, mw_ref, mb_ref,
                           y_ref, res_ref, normed_scr, *, eps):
    @pl.when(pl.program_id(1) == 0)
    def _():
        # First block: residual = hidden_states (no zero tensor from HBM).
        resid = h_ref[...].astype(jnp.float32)
        normed_scr[...] = _ln_two_pass(resid, nw_ref, nb_ref, eps)
        res_ref[...] = resid
    _mix(normed_scr, mw_ref, mb_ref, y_ref)


# ---------------------------------------------------------------------------
# VMEM budgeting / tile planning
# ---------------------------------------------------------------------------
def _vmem_capacity_bytes():
    try:
        info = pltpu.get_tpu_info()
        cap = int(getattr(info, "vmem_capacity_bytes", 0))
        if cap > 0:
            return cap
    except Exception:
        pass
    return 64 * 1024 * 1024            # conservative default (v7x per-TC)


def _plan_tiles(bl, d, h_bytes, plan_budget):
    """Pick (tm, tn) so the pipeline fits the per-generation VMEM budget."""
    # dtype packing granule for the row (sublane) axis.
    granule = 8 if h_bytes >= 4 else (16 if h_bytes == 2 else 32)

    # N (weight-column) tiling: keep the bf16 weight fully resident when it
    # fits ~1/4 of the budget; otherwise stream (d, tn) column panels.
    if d * d * 2 <= plan_budget // 4 or d <= 256:
        tn = d
        w_bufs = 1                      # grid-invariant -> single buffer
    else:
        cols = (plan_budget // 4) // (2 * d * 2)       # 2 buffers x bf16
        tn = max(128, min(d, (cols // 128) * 128))
        w_bufs = 2
    w_bytes = d * tn * 2 * w_bufs

    # M tiling: double-buffered streamed tiles (h, residual-in, residual-out,
    # y) + one f32 normed scratch + ~2 f32 LayerNorm temporaries per row.
    per_row = (d * (2 * h_bytes + 2 * 4 + 2 * 4 + 4 + 2 * 4)
               + 2 * tn * h_bytes)
    fixed = w_bytes + 4 * d * 4 + (1 << 20)            # row params + slack
    tm = (plan_budget - fixed) // per_row
    tm = max(granule, min(1024, (tm // granule) * granule))

    # Keep >= 2 M-steps so both v7x TensorCores get work (harmless on 1-TC chips).
    if bl > granule:
        half = -(-bl // 2)
        tm = min(tm, -(-half // granule) * granule)
    tm = min(tm, -(-bl // granule) * granule)
    return tm, tn


# ---------------------------------------------------------------------------
# Wrapper
# ---------------------------------------------------------------------------
def dynamic_block_forward(hidden_states, residual, params, *, eps=1e-5,
                          donate_residual=False):
    """DynamicBlock.forward -> (mixed, residual_fp32, block_policy)."""
    B, L, D = hidden_states.shape
    BL = B * L
    dtype = hidden_states.dtype
    h2 = hidden_states.reshape(BL, D)

    # MXU operands in bf16; accumulation stays f32 inside the kernel.
    mw = params["mixer_w"].astype(jnp.bfloat16)
    nw = params["norm_weight"].reshape(1, D)
    nb = params["norm_bias"].reshape(1, D)
    mb = params["mixer_b"].reshape(1, D)

    cap = _vmem_capacity_bytes()
    plan_budget = int(cap * 0.70)
    vmem_limit = min(int(cap * 0.90), 127 * 1024 * 1024)

    tm, tn = _plan_tiles(BL, D, jnp.dtype(dtype).itemsize, plan_budget)
    mt, nt = pl.cdiv(BL, tm), pl.cdiv(D, tn)
    grid = (mt, nt)

    cparams = pltpu.CompilerParams(
        dimension_semantics=("parallel", "arbitrary"),
        vmem_limit_bytes=vmem_limit,
    )
    out_shape = (
        jax.ShapeDtypeStruct((BL, D), dtype),           # mixer output
        jax.ShapeDtypeStruct((BL, D), jnp.float32),     # residual in fp32
    )

    def _spec(shape, index_map, single_buffered=False):
        # Grid-invariant operands only need one VMEM buffer.
        if single_buffered and hasattr(pl, "Buffered"):
            try:
                return pl.BlockSpec(shape, index_map,
                                    pipeline_mode=pl.Buffered(1))
            except TypeError:
                pass
        return pl.BlockSpec(shape, index_map)

    def _run(use_single_buffer):
        sb = use_single_buffer
        tile_in = pl.BlockSpec((tm, D), lambda i, j: (i, 0))
        row = _spec((1, D), lambda i, j: (0, 0), sb)              # LN params
        w_spec = _spec((D, tn), lambda i, j: (0, j), sb and nt == 1)
        mb_spec = _spec((1, tn), lambda i, j: (0, j), sb and nt == 1)
        y_spec = pl.BlockSpec((tm, tn), lambda i, j: (i, j))
        res_spec = pl.BlockSpec((tm, D), lambda i, j: (i, 0))
        scratch = [pltpu.VMEM((tm, D), jnp.float32)]              # cached normed

        if residual is None:
            return pl.pallas_call(
                partial(_fused_ln_mixer_kernel, eps=eps),
                grid=grid, out_shape=out_shape,
                in_specs=[tile_in, row, row, w_spec, mb_spec],
                out_specs=(y_spec, res_spec),
                scratch_shapes=scratch,
                compiler_params=cparams,
            )(h2, nw, nb, mw, mb)

        # Do NOT downcast the incoming residual; keep its (fp32) dtype.
        r2 = residual.reshape(BL, D)
        io_alias = ({1: 1} if (donate_residual and r2.dtype == jnp.float32)
                    else {})
        return pl.pallas_call(
            partial(_fused_add_ln_mixer_kernel, eps=eps),
            grid=grid, out_shape=out_shape,
            in_specs=[tile_in, tile_in, row, row, w_spec, mb_spec],
            out_specs=(y_spec, res_spec),
            scratch_shapes=scratch,
            input_output_aliases=io_alias,
            compiler_params=cparams,
        )(h2, r2, nw, nb, mw, mb)

    try:
        mixed, resid_f32 = _run(True)
    except Exception:
        # Fallback: default double-buffering everywhere.
        mixed, resid_f32 = _run(False)

    block_policy = None            # mixer was built with block_keep_ratio=None
    return (mixed.reshape(B, L, D),
            resid_f32.reshape(B, L, D),
            block_policy)


# ---------------------------------------------------------------------------
# Pure-JAX reference (full f32 matmul) for sanity checks
# ---------------------------------------------------------------------------
def _reference(hidden_states, residual, params, eps=1e-5):
    if residual is None:
        resid = hidden_states.astype(jnp.float32)
    else:
        resid = residual.astype(jnp.float32) + hidden_states.astype(jnp.float32)
    mean = jnp.mean(resid, axis=-1, keepdims=True)
    var = jnp.mean((resid - mean) ** 2, axis=-1, keepdims=True)
    normed = (resid - mean) * jax.lax.rsqrt(var + eps)
    normed = (normed * params["norm_weight"].astype(jnp.float32)
              + params["norm_bias"].astype(jnp.float32))
    mixed = (normed @ params["mixer_w"].astype(jnp.float32)
             + params["mixer_b"].astype(jnp.float32))
    return mixed.astype(hidden_states.dtype), resid, None


if __name__ == "__main__":
    key = jax.random.PRNGKey(0)
    k1, k2, k3, k4 = jax.random.split(key, 4)

    B, L, D = 2, 8, 128
    hidden_states = jax.random.normal(k1, (B, L, D), jnp.float32)
    residual = jax.random.normal(k2, (B, L, D), jnp.float32)

    params = {
        "norm_weight": jnp.ones((D,), jnp.float32),      # nn.LayerNorm init
        "norm_bias": jnp.zeros((D,), jnp.float32),
        "mixer_w": 0.02 * jax.random.normal(k3, (D, D), jnp.float32),
        "mixer_b": 0.01 * jax.random.normal(k4, (D,), jnp.float32),
    }

    # NOTE: mixer weight is fed to the MXU in bf16 -> loose tolerance on the
    # matmul output; residual path is exact f32.

    # 1) residual provided
    out, resid_out, policy = dynamic_block_forward(hidden_states, residual, params)
    jax.block_until_ready((out, resid_out))
    ref_out, ref_resid, _ = _reference(hidden_states, residual, params)
    assert out.shape == (B, L, D) and resid_out.dtype == jnp.float32
    assert policy is None
    assert jnp.allclose(out, ref_out, atol=2e-2, rtol=2e-2)
    assert jnp.allclose(resid_out, ref_resid, atol=1e-5, rtol=1e-5)

    # 2) first block (residual=None)
    out0, resid0, _ = dynamic_block_forward(hidden_states, None, params)
    jax.block_until_ready((out0, resid0))
    ref_out0, ref_resid0, _ = _reference(hidden_states, None, params)
    assert jnp.allclose(out0, ref_out0, atol=2e-2, rtol=2e-2)
    assert jnp.allclose(resid0, ref_resid0, atol=1e-5, rtol=1e-5)

    # 3) ragged token count (BL not a multiple of the tile granule)
    h_r = jax.random.normal(k1, (2, 7, D), jnp.float32)
    r_r = jax.random.normal(k2, (2, 7, D), jnp.float32)
    out_r, res_r, _ = dynamic_block_forward(h_r, r_r, params)
    jax.block_until_ready((out_r, res_r))
    ref_out_r, ref_res_r, _ = _reference(h_r, r_r, params)
    assert jnp.allclose(out_r, ref_out_r, atol=2e-2, rtol=2e-2)
    assert jnp.allclose(res_r, ref_res_r, atol=1e-5, rtol=1e-5)

    # 4) bf16 activations with fp32 residual (residual_in_fp32=True stacks)
    h_b = jax.random.normal(k3, (2, 16, D), jnp.float32).astype(jnp.bfloat16)
    r_b = jax.random.normal(k4, (2, 16, D), jnp.float32)
    out_b, res_b, _ = dynamic_block_forward(h_b, r_b, params)
    jax.block_until_ready((out_b, res_b))
    ref_out_b, ref_res_b, _ = _reference(h_b, r_b, params)
    assert out_b.dtype == jnp.bfloat16 and res_b.dtype == jnp.float32
    assert jnp.allclose(out_b.astype(jnp.float32), ref_out_b.astype(jnp.float32),
                        atol=3e-2, rtol=3e-2)
    assert jnp.allclose(res_b, ref_res_b, atol=1e-5, rtol=1e-5)

    print("KERNEL_OK")
</pallas_src>

<mosaic_0001>
module attributes {stable_mosaic.version = 11 : i64} {
  func.func @_fused_add_ln_mixer_kernel(%arg0: i32, %arg1: i32, %arg2: memref<8x128xf32, #tpu.memory_space<vmem>>, %arg3: memref<8x128xf32, #tpu.memory_space<vmem>>, %arg4: memref<1x128xf32, #tpu.memory_space<vmem>>, %arg5: memref<1x128xf32, #tpu.memory_space<vmem>>, %arg6: memref<128x128xbf16, #tpu.memory_space<vmem>>, %arg7: memref<1x128xf32, #tpu.memory_space<vmem>>, %arg8: memref<8x128xf32, #tpu.memory_space<vmem>>, %arg9: memref<8x128xf32, #tpu.memory_space<vmem>>, %arg10: memref<8x128xf32, #tpu.memory_space<vmem>>) attributes {dimension_semantics = [#tpu.dimension_semantics<parallel>, #tpu.dimension_semantics<arbitrary>], iteration_bounds = array<i64: 2, 1>, scalar_prefetch = 0 : i64, scratch_operands = 1 : i64, tpu.core_type = #tpu.core_type<tc>, window_params = [{transform_indices = @transform_0, window_bounds = array<i64: 8, 128>}, {transform_indices = @transform_1, window_bounds = array<i64: 8, 128>}, {pipeline_mode = #tpu.pipeline_mode<synchronous>, transform_indices = @transform_2, window_bounds = array<i64: 1, 128>}, {pipeline_mode = #tpu.pipeline_mode<synchronous>, transform_indices = @transform_3, window_bounds = array<i64: 1, 128>}, {pipeline_mode = #tpu.pipeline_mode<synchronous>, transform_indices = @transform_4, window_bounds = array<i64: 128, 128>}, {pipeline_mode = #tpu.pipeline_mode<synchronous>, transform_indices = @transform_5, window_bounds = array<i64: 1, 128>}, {transform_indices = @transform_6, window_bounds = array<i64: 8, 128>}, {transform_indices = @transform_7, window_bounds = array<i64: 8, 128>}]} {
    %c0_i32 = arith.constant 0 : i32
    %0 = arith.cmpi eq, %arg1, %c0_i32 : i32
    %1 = arith.extui %0 : i1 to i32
    %c0_i32_0 = arith.constant 0 : i32
    %2 = arith.cmpi ne, %1, %c0_i32_0 : i32
    scf.if %2 {
      %c0_8 = arith.constant 0 : index
      %c0_9 = arith.constant 0 : index
      %11 = vector.load %arg3[%c0_8, %c0_9] : memref<8x128xf32, #tpu.memory_space<vmem>>, vector<8x128xf32>
      %c0_10 = arith.constant 0 : index
      %c0_11 = arith.constant 0 : index
      %12 = vector.load %arg2[%c0_10, %c0_11] : memref<8x128xf32, #tpu.memory_space<vmem>>, vector<8x128xf32>
      %13 = arith.addf %11, %12 : vector<8x128xf32>
      %cst_12 = arith.constant dense<0.000000e+00> : vector<8xf32>
      %14 = vector.multi_reduction <add>, %13, %cst_12 [1] : vector<8x128xf32> to vector<8xf32>
      %15 = vector.shape_cast %14 : vector<8xf32> to vector<8x1xf32>
      %cst_13 = arith.constant 1.280000e+02 : f32
      %16 = vector.broadcast %cst_13 : f32 to vector<8x1xf32>
      %17 = arith.divf %15, %16 : vector<8x1xf32>
      %18 = vector.broadcast %17 : vector<8x1xf32> to vector<8x128xf32>
      %19 = arith.subf %13, %18 : vector<8x128xf32>
      %20 = arith.mulf %19, %19 : vector<8x128xf32>
      %cst_14 = arith.constant dense<0.000000e+00> : vector<8xf32>
      %21 = vector.multi_reduction <add>, %20, %cst_14 [1] : vector<8x128xf32> to vector<8xf32>
      %22 = vector.shape_cast %21 : vector<8xf32> to vector<8x1xf32>
      %cst_15 = arith.constant 1.280000e+02 : f32
      %23 = vector.broadcast %cst_15 : f32 to vector<8x1xf32>
      %24 = arith.divf %22, %23 : vector<8x1xf32>
      %cst_16 = arith.constant 9.99999974E-6 : f32
      %25 = vector.broadcast %cst_16 : f32 to vector<8x1xf32>
      %26 = arith.addf %24, %25 : vector<8x1xf32>
      %27 = math.rsqrt %26 : vector<8x1xf32>
      %28 = vector.broadcast %27 : vector<8x1xf32> to vector<8x128xf32>
      %29 = arith.mulf %19, %28 : vector<8x128xf32>
      %c0_17 = arith.constant 0 : index
      %c0_18 = arith.constant 0 : index
      %30 = vector.load %arg4[%c0_17, %c0_18] : memref<1x128xf32, #tpu.memory_space<vmem>>, vector<1x128xf32>
      %31 = vector.broadcast %30 : vector<1x128xf32> to vector<8x128xf32>
      %32 = arith.mulf %29, %31 : vector<8x128xf32>
      %c0_19 = arith.constant 0 : index
      %c0_20 = arith.constant 0 : index
      %33 = vector.load %arg5[%c0_19, %c0_20] : memref<1x128xf32, #tpu.memory_space<vmem>>, vector<1x128xf32>
      %34 = vector.broadcast %33 : vector<1x128xf32> to vector<8x128xf32>
      %35 = arith.addf %32, %34 : vector<8x128xf32>
      %c0_21 = arith.constant 0 : index
      %c0_22 = arith.constant 0 : index
      %36 = vector.load %arg10[%c0_21, %c0_22] : memref<8x128xf32, #tpu.memory_space<vmem>>, vector<8x128xf32>
      tpu.vector_store %arg10[%c0_21, %c0_22], %35 {strides = array<i32>} : memref<8x128xf32, #tpu.memory_space<vmem>>, vector<8x128xf32>,
      %c0_23 = arith.constant 0 : index
      %c0_24 = arith.constant 0 : index
      %37 = vector.load %arg9[%c0_23, %c0_24] : memref<8x128xf32, #tpu.memory_space<vmem>>, vector<8x128xf32>
      tpu.vector_store %arg9[%c0_23, %c0_24], %13 {strides = array<i32>} : memref<8x128xf32, #tpu.memory_space<vmem>>, vector<8x128xf32>,
    } else {
    }
    %c0 = arith.constant 0 : index
    %c0_1 = arith.constant 0 : index
    %3 = vector.load %arg10[%c0, %c0_1] : memref<8x128xf32, #tpu.memory_space<vmem>>, vector<8x128xf32>
    %4 = arith.truncf %3 : vector<8x128xf32> to vector<8x128xbf16>
    %c0_2 = arith.constant 0 : index
    %c0_3 = arith.constant 0 : index
    %5 = vector.load %arg6[%c0_2, %c0_3] : memref<128x128xbf16, #tpu.memory_space<vmem>>, vector<128x128xbf16>
    %cst = arith.constant dense<0.000000e+00> : vector<8x128xf32>
    %6 = tpu.matmul %4, %5, %cst {dimension_numbers = #tpu.dot_dimension_numbers<[1], [0], [0], [1], [0, 0, 1, 1], [], []>} : vector<8x128xbf16>, vector<128x128xbf16>, vector<8x128xf32> -> vector<8x128xf32>
    %c0_4 = arith.constant 0 : index
    %c0_5 = arith.constant 0 : index
    %7 = vector.load %arg7[%c0_4, %c0_5] : memref<1x128xf32, #tpu.memory_space<vmem>>, vector<1x128xf32>
    %8 = vector.broadcast %7 : vector<1x128xf32> to vector<8x128xf32>
    %9 = arith.addf %6, %8 : vector<8x128xf32>
    %c0_6 = arith.constant 0 : index
    %c0_7 = arith.constant 0 : index
    %10 = vector.load %arg8[%c0_6, %c0_7] : memref<8x128xf32, #tpu.memory_space<vmem>>, vector<8x128xf32>
    tpu.vector_store %arg8[%c0_6, %c0_7], %9 {strides = array<i32>} : memref<8x128xf32, #tpu.memory_space<vmem>>, vector<8x128xf32>,
    return
  }
  func.func @transform_0(%arg0: i32, %arg1: i32) -> (i32, i32) {
    %c0_i32 = arith.constant 0 : i32
    %c0_i32_0 = arith.constant 0 : i32
    return %arg0, %c0_i32 : i32, i32
  }
  func.func @transform_1(%arg0: i32, %arg1: i32) -> (i32, i32) {
    %c0_i32 = arith.constant 0 : i32
    %c0_i32_0 = arith.constant 0 : i32
    return %arg0, %c0_i32 : i32, i32
  }
  func.func @transform_2(%arg0: i32, %arg1: i32) -> (i32, i32) {
    %c0_i32 = arith.constant 0 : i32
    %c0_i32_0 = arith.constant 0 : i32
    %c0_i32_1 = arith.constant 0 : i32
    return %c0_i32, %c0_i32_0 : i32, i32
  }
  func.func @transform_3(%arg0: i32, %arg1: i32) -> (i32, i32) {
    %c0_i32 = arith.constant 0 : i32
    %c0_i32_0 = arith.constant 0 : i32
    %c0_i32_1 = arith.constant 0 : i32
    return %c0_i32, %c0_i32_0 : i32, i32
  }
  func.func @transform_4(%arg0: i32, %arg1: i32) -> (i32, i32) {
    %c0_i32 = arith.constant 0 : i32
    %c0_i32_0 = arith.constant 0 : i32
    return %c0_i32, %arg1 : i32, i32
  }
  func.func @transform_5(%arg0: i32, %arg1: i32) -> (i32, i32) {
    %c0_i32 = arith.constant 0 : i32
    %c0_i32_0 = arith.constant 0 : i32
    return %c0_i32, %arg1 : i32, i32
  }
  func.func @transform_6(%arg0: i32, %arg1: i32) -> (i32, i32) {
    %c0_i32 = arith.constant 0 : i32
    return %arg0, %arg1 : i32, i32
  }
  func.func @transform_7(%arg0: i32, %arg1: i32) -> (i32, i32) {
    %c0_i32 = arith.constant 0 : i32
    %c0_i32_0 = arith.constant 0 : i32
    return %arg0, %c0_i32 : i32, i32
  }
}

module attributes {stable_mosaic.version = 11 : i64} {
  func.func @_fused_add_ln_mixer_kernel(%arg0: i32, %arg1: i32, %arg2: memref<8x128xf32, #tpu.memory_space<vmem>>, %arg3: memref<8x128xf32, #tpu.memory_space<vmem>>, %arg4: memref<1x128xf32, #tpu.memory_space<vmem>>, %arg5: memref<1x128xf32, #tpu.memory_space<vmem>>, %arg6: memref<128x128xbf16, #tpu.memory_space<vmem>>, %arg7: memref<1x128xf32, #tpu.memory_space<vmem>>, %arg8: memref<8x128xf32, #tpu.memory_space<vmem>>, %arg9: memref<8x128xf32, #tpu.memory_space<vmem>>, %arg10: memref<8x128xf32, #tpu.memory_space<vmem>>) attributes {dimension_semantics = [#tpu.dimension_semantics<parallel>, #tpu.dimension_semantics<arbitrary>], iteration_bounds = array<i64: 2, 1>, scalar_prefetch = 0 : i64, scratch_operands = 1 : i64, tpu.core_type = #tpu.core_type<tc>, window_params = [{transform_indices = @transform_0, window_bounds = array<i64: 8, 128>}, {transform_indices = @transform_1, window_bounds = array<i64: 8, 128>}, {pipeline_mode = #tpu.pipeline_mode<synchronous>, transform_indices = @transform_2, window_bounds = array<i64: 1, 128>}, {pipeline_mode = #tpu.pipeline_mode<synchronous>, transform_indices = @transform_3, window_bounds = array<i64: 1, 128>}, {transform_indices = @transform_4, window_bounds = array<i64: 128, 128>}, {transform_indices = @transform_5, window_bounds = array<i64: 1, 128>}, {transform_indices = @transform_6, window_bounds = array<i64: 8, 128>}, {transform_indices = @transform_7, window_bounds = array<i64: 8, 128>}]} {
    %c0_i32 = arith.constant 0 : i32
    %0 = arith.cmpi eq, %arg1, %c0_i32 : i32
    %1 = arith.extui %0 : i1 to i32
    %c0_i32_0 = arith.constant 0 : i32
    %2 = arith.cmpi ne, %1, %c0_i32_0 : i32
    scf.if %2 {
      %c0_8 = arith.constant 0 : index
      %c0_9 = arith.constant 0 : index
      %11 = vector.load %arg3[%c0_8, %c0_9] : memref<8x128xf32, #tpu.memory_space<vmem>>, vector<8x128xf32>
      %c0_10 = arith.constant 0 : index
      %c0_11 = arith.constant 0 : index
      %12 = vector.load %arg2[%c0_10, %c0_11] : memref<8x128xf32, #tpu.memory_space<vmem>>, vector<8x128xf32>
      %13 = arith.addf %11, %12 : vector<8x128xf32>
      %cst_12 = arith.constant dense<0.000000e+00> : vector<8xf32>
      %14 = vector.multi_reduction <add>, %13, %cst_12 [1] : vector<8x128xf32> to vector<8xf32>
      %15 = vector.shape_cast %14 : vector<8xf32> to vector<8x1xf32>
      %cst_13 = arith.constant 1.280000e+02 : f32
      %16 = vector.broadcast %cst_13 : f32 to vector<8x1xf32>
      %17 = arith.divf %15, %16 : vector<8x1xf32>
      %18 = vector.broadcast %17 : vector<8x1xf32> to vector<8x128xf32>
      %19 = arith.subf %13, %18 : vector<8x128xf32>
      %20 = arith.mulf %19, %19 : vector<8x128xf32>
      %cst_14 = arith.constant dense<0.000000e+00> : vector<8xf32>
      %21 = vector.multi_reduction <add>, %20, %cst_14 [1] : vector<8x128xf32> to vector<8xf32>
      %22 = vector.shape_cast %21 : vector<8xf32> to vector<8x1xf32>
      %cst_15 = arith.constant 1.280000e+02 : f32
      %23 = vector.broadcast %cst_15 : f32 to vector<8x1xf32>
      %24 = arith.divf %22, %23 : vector<8x1xf32>
      %cst_16 = arith.constant 9.99999974E-6 : f32
      %25 = vector.broadcast %cst_16 : f32 to vector<8x1xf32>
      %26 = arith.addf %24, %25 : vector<8x1xf32>
      %27 = math.rsqrt %26 : vector<8x1xf32>
      %28 = vector.broadcast %27 : vector<8x1xf32> to vector<8x128xf32>
      %29 = arith.mulf %19, %28 : vector<8x128xf32>
      %c0_17 = arith.constant 0 : index
      %c0_18 = arith.constant 0 : index
      %30 = vector.load %arg4[%c0_17, %c0_18] : memref<1x128xf32, #tpu.memory_space<vmem>>, vector<1x128xf32>
      %31 = vector.broadcast %30 : vector<1x128xf32> to vector<8x128xf32>
      %32 = arith.mulf %29, %31 : vector<8x128xf32>
      %c0_19 = arith.constant 0 : index
      %c0_20 = arith.constant 0 : index
      %33 = vector.load %arg5[%c0_19, %c0_20] : memref<1x128xf32, #tpu.memory_space<vmem>>, vector<1x128xf32>
      %34 = vector.broadcast %33 : vector<1x128xf32> to vector<8x128xf32>
      %35 = arith.addf %32, %34 : vector<8x128xf32>
      %c0_21 = arith.constant 0 : index
      %c0_22 = arith.constant 0 : index
      %36 = vector.load %arg10[%c0_21, %c0_22] : memref<8x128xf32, #tpu.memory_space<vmem>>, vector<8x128xf32>
      tpu.vector_store %arg10[%c0_21, %c0_22], %35 {strides = array<i32>} : memref<8x128xf32, #tpu.memory_space<vmem>>, vector<8x128xf32>,
      %c0_23 = arith.constant 0 : index
      %c0_24 = arith.constant 0 : index
      %37 = vector.load %arg9[%c0_23, %c0_24] : memref<8x128xf32, #tpu.memory_space<vmem>>, vector<8x128xf32>
      tpu.vector_store %arg9[%c0_23, %c0_24], %13 {strides = array<i32>} : memref<8x128xf32, #tpu.memory_space<vmem>>, vector<8x128xf32>,
    } else {
    }
    %c0 = arith.constant 0 : index
    %c0_1 = arith.constant 0 : index
    %3 = vector.load %arg10[%c0, %c0_1] : memref<8x128xf32, #tpu.memory_space<vmem>>, vector<8x128xf32>
    %4 = arith.truncf %3 : vector<8x128xf32> to vector<8x128xbf16>
    %c0_2 = arith.constant 0 : index
    %c0_3 = arith.constant 0 : index
    %5 = vector.load %arg6[%c0_2, %c0_3] : memref<128x128xbf16, #tpu.memory_space<vmem>>, vector<128x128xbf16>
    %cst = arith.constant dense<0.000000e+00> : vector<8x128xf32>
    %6 = tpu.matmul %4, %5, %cst {dimension_numbers = #tpu.dot_dimension_numbers<[1], [0], [0], [1], [0, 0, 1, 1], [], []>} : vector<8x128xbf16>, vector<128x128xbf16>, vector<8x128xf32> -> vector<8x128xf32>
    %c0_4 = arith.constant 0 : index
    %c0_5 = arith.constant 0 : index
    %7 = vector.load %arg7[%c0_4, %c0_5] : memref<1x128xf32, #tpu.memory_space<vmem>>, vector<1x128xf32>
    %8 = vector.broadcast %7 : vector<1x128xf32> to vector<8x128xf32>
    %9 = arith.addf %6, %8 : vector<8x128xf32>
    %c0_6 = arith.constant 0 : index
    %c0_7 = arith.constant 0 : index
    %10 = vector.load %arg8[%c0_6, %c0_7] : memref<8x128xf32, #tpu.memory_space<vmem>>, vector<8x128xf32>
    tpu.vector_store %arg8[%c0_6, %c0_7], %9 {strides = array<i32>} : memref<8x128xf32, #tpu.memory_space<vmem>>, vector<8x128xf32>,
    return
  }
  func.func @transform_0(%arg0: i32, %arg1: i32) -> (i32, i32) {
    %c0_i32 = arith.constant 0 : i32
    %c0_i32_0 = arith.constant 0 : i32
    return %arg0, %c0_i32 : i32, i32
  }
  func.func @transform_1(%arg0: i32, %arg1: i32) -> (i32, i32) {
    %c0_i32 = arith.constant 0 : i32
    %c0_i32_0 = arith.constant 0 : i32
    return %arg0, %c0_i32 : i32, i32
  }
  func.func @transform_2(%arg0: i32, %arg1: i32) -> (i32, i32) {
    %c0_i32 = arith.constant 0 : i32
    %c0_i32_0 = arith.constant 0 : i32
    %c0_i32_1 = arith.constant 0 : i32
    return %c0_i32, %c0_i32_0 : i32, i32
  }
  func.func @transform_3(%arg0: i32, %arg1: i32) -> (i32, i32) {
    %c0_i32 = arith.constant 0 : i32
    %c0_i32_0 = arith.constant 0 : i32
    %c0_i32_1 = arith.constant 0 : i32
    return %c0_i32, %c0_i32_0 : i32, i32
  }
  func.func @transform_4(%arg0: i32, %arg1: i32) -> (i32, i32) {
    %c0_i32 = arith.constant 0 : i32
    %c0_i32_0 = arith.constant 0 : i32
    return %c0_i32, %arg1 : i32, i32
  }
  func.func @transform_5(%arg0: i32, %arg1: i32) -> (i32, i32) {
    %c0_i32 = arith.constant 0 : i32
    %c0_i32_0 = arith.constant 0 : i32
    return %c0_i32, %arg1 : i32, i32
  }
  func.func @transform_6(%arg0: i32, %arg1: i32) -> (i32, i32) {
    %c0_i32 = arith.constant 0 : i32
    return %arg0, %arg1 : i32, i32
  }
  func.func @transform_7(%arg0: i32, %arg1: i32) -> (i32, i32) {
    %c0_i32 = arith.constant 0 : i32
    %c0_i32_0 = arith.constant 0 : i32
    return %arg0, %c0_i32 : i32, i32
  }
}

</mosaic_0001>

<llo_original>
// kernel: tpu_custom_call.1
$region0: #{tpu_custom_call.1}
  #allocation0 [shape = 'u32[]', space=smem, size = 0x4, offset = 0x4, fixed_abs, tag = 'smem constant byte address 0x4 - core index']
  #allocation1 [shape = 'u32[144,128]{1,0:T(1,128)}', space=vmem, size = 0x12000, scoped, tag = 'internal scratch']
  #allocation2 [shape = 'f32[8,128]{1,0:T(8,128)}', space=vmem, size = 0x1000, scoped, tag = 'scratch operand']
  %s0 = inlined_call_operand.hbm [shape: f32[16,128], index: 0, kind: input, shape index: {}]
  %s1 = inlined_call_operand.hbm [shape: f32[16,128], index: 1, kind: input, shape index: {}]
  %s2 = inlined_call_operand.vmem [shape: f32[1,128], index: 2, kind: input, shape index: {}]
  %s3 = inlined_call_operand.vmem [shape: f32[1,128], index: 3, kind: input, shape index: {}]
  %s4 = inlined_call_operand.hbm [shape: bf16[128,128], index: 4, kind: input, shape index: {}]
  %s5 = inlined_call_operand.vmem [shape: f32[1,128], index: 5, kind: input, shape index: {}]
  %s6 = inlined_call_operand.hbm [shape: f32[16,128], index: 6, kind: output, shape index: {0}]
  %s7 = inlined_call_operand.hbm [shape: f32[16,128], index: 7, kind: output, shape index: {1}]
  %8 = xla_tuple %s6, %s7
  %s9 = sld [smem:[#allocation0]]
  $region81: #{tpu_custom_call.1} parent=0
    _
  %s11 = ssub.s32 1, %s9
  %s12 = scalar_select 0, %s11, %s9
  $region1: #{tpu_custom_call.1} parent=0
    #allocation3 [shape = 'u8[8192]{0}', space=vmem, size = 0x2000, scoped, tag = 'input window, operand 0']
    #allocation4 [shape = 's32[2]{0}', space=sflag, size = 0x8, scoped, tag = 'scoped memory for tpu_custom_call.1']
    #allocation5 [shape = 's32[2]{0}', space=sflag, size = 0x8, scoped, tag = 'scoped memory for tpu_custom_call.1']
    #allocation6 [shape = 'u8[8192]{0}', space=vmem, size = 0x2000, scoped, tag = 'input window, operand 1']
    #allocation7 [shape = 's32[2]{0}', space=sflag, size = 0x8, scoped, tag = 'scoped memory for tpu_custom_call.1']
    #allocation8 [shape = 'u8[32768]{0}', space=vmem, size = 0x8000, scoped, tag = 'input window, operand 4, single buffered']
    #allocation9 [shape = 'u8[8192]{0}', space=vmem, size = 0x2000, scoped, tag = 'output window, operand 0']
    #allocation10 [shape = 'u8[8192]{0}', space=vmem, size = 0x2000, scoped, tag = 'output window, operand 1']
    #allocation11 [shape = 's32[2]{0}', space=sflag, size = 0x8, scoped, tag = 'scoped memory for tpu_custom_call.1']
    %13 = vsyncpa [#allocation4], 0
    %s14 = scalar_lea.sflag [#allocation4], 1
    %15 = vsyncpa %s14, 0
    %16 = vsyncpa [#allocation7], 0
    %s17 = scalar_lea.sflag [#allocation7], 1
    %18 = vsyncpa %s17, 0
    %19 = vsyncpa [#allocation5], 0
    %s20 = scalar_lea.sflag [#allocation5], 1
    %21 = vsyncpa %s20, 0
    %22 = vsyncpa [#allocation11], 0
    %s23 = scalar_lea.sflag [#allocation11], 1
    %24 = vsyncpa %s23, 0
    loop: start=0, step=1, limit=4
    $region2: #{tpu_custom_call.1} parent=1 // loop_pre_header
      _
    $region3: #{tpu_custom_call.1} parent=1 // loop_header
      %s26 = sphi 0, %s30
      %p27 = scmp.ge.s32.totalorder %s26, 4
      %s33 = sphi 0, %s45
      %s34 = sphi 0, %s41
      %s35 = sphi 0, %s33
      %s36 = sphi 0, %s34
      %s37 = sphi 0, %s35
      %s38 = sphi 0, %s36
      %s48 = sphi 0, %s50
      %s51 = sphi 0, %s48
      %s52 = sphi 0, %s51
      %s68 = sphi 0, %s52
      %s74 = sphi 0, %s76
      %s77 = sphi 0, %s74
      %s78 = sphi 0, %s77
      %s94 = sphi 0, %s78
      %s98 = sphi 0, %s98
      %s100 = sphi 0, %s98
      %s101 = sphi 0, %s100
      %s115 = sphi 0, %s101
      %s119 = sphi 0, %s119
      %s121 = sphi 0, %s119
      %s122 = sphi 0, %s121
      %s136 = sphi 0, %s122
      %s142 = sphi 0, %s144
      %s145 = sphi 0, %s142
      %s146 = sphi 0, %s145
      %s162 = sphi 0, %s146
      %s168 = sphi 0, %s170
      %s171 = sphi 0, %s168
      %s172 = sphi 0, %s171
      %s188 = sphi 0, %s172
      %s196 = sphi 0, %s198
      %s199 = sphi 0, %s196
      %s200 = sphi 0, %s199
      %s216 = sphi 0, %s200
      %s222 = sphi 0, %s224
      %s225 = sphi 0, %s222
      %s226 = sphi 0, %s225
      %s242 = sphi 0, %s226
    $region4: #{tpu_custom_call.1} parent=1 // loop_header_branch
      %29 = sbr.rel (%p27) target = $region8
    $region5: #{tpu_custom_call.1} parent=1 // loop_body
      %s31 = ssub.s32 %s26, 1
      %s32 = ssub.s32 %s26, 2
      %s39 = sadd.s32 1, %s34
      %p40 = scmp.ge.s32.totalorder %s39, 1
      %s41 = scalar_select %p40, 0, %s39
      %s42 = sadd.s32 1, %s33
      %s43 = scalar_select %p40, %s42, %s33
      %p44 = scmp.ge.s32.totalorder %s43, 2
      %s45 = scalar_select %p44, 0, %s43
      %s46 = ssub.s32 %s33, %s45
      %p47 = scmp.eq.s32.totalorder %s46, 0
      %s49 = sadd.s32 %s48, 1
      %s50 = scalar_select %p47, %s48, %s49
      %p53 = pneg %p47
      %p54 = scmp.eq.s32.totalorder %s26, 1
      %p55 = por %p53, %p54
      %p56 = scmp.ne.s32.totalorder %s48, %s51
      %p57 = scmp.eq.s32.totalorder %s26, 0
      %p58 = por %p56, %p57
      %p59 = scmp.ne.s32.totalorder %s48, %s51
      %p60 = scmp.eq.s32.totalorder %s31, 1
      %p61 = por %p59, %p60
      %p62 = scmp.ne.s32.totalorder %s51, %s52
      %p63 = scmp.eq.s32.totalorder %s31, 0
      %p64 = por %p62, %p63
      %p65 = scmp.ne.s32.totalorder %s51, %s52
      %p66 = scmp.eq.s32.totalorder %s32, 1
      %p67 = por %p65, %p66
      %p69 = scmp.ne.s32.totalorder %s52, %s68
      %p70 = scmp.eq.s32.totalorder %s32, 0
      %p71 = por %p69, %p70
      %s72 = ssub.s32 %s33, %s45
      %p73 = scmp.eq.s32.totalorder %s72, 0
      %s75 = sadd.s32 %s74, 1
      %s76 = scalar_select %p73, %s74, %s75
      %p79 = pneg %p73
      %p80 = scmp.eq.s32.totalorder %s26, 1
      %p81 = por %p79, %p80
      %p82 = scmp.ne.s32.totalorder %s74, %s77
      %p83 = scmp.eq.s32.totalorder %s26, 0
      %p84 = por %p82, %p83
      %p85 = scmp.ne.s32.totalorder %s74, %s77
      %p86 = scmp.eq.s32.totalorder %s31, 1
      %p87 = por %p85, %p86
      %p88 = scmp.ne.s32.totalorder %s77, %s78
      %p89 = scmp.eq.s32.totalorder %s31, 0
      %p90 = por %p88, %p89
      %p91 = scmp.ne.s32.totalorder %s77, %s78
      %p92 = scmp.eq.s32.totalorder %s32, 1
      %p93 = por %p91, %p92
      %p95 = scmp.ne.s32.totalorder %s78, %s94
      %p96 = scmp.eq.s32.totalorder %s32, 0
      %p97 = por %p95, %p96
      %s99 = sadd.s32 %s98, 1
      %p102 = scmp.eq.s32.totalorder %s26, 1
      %p103 = scmp.ne.s32.totalorder %s98, %s100
      %p104 = scmp.eq.s32.totalorder %s26, 0
      %p105 = por %p103, %p104
      %p106 = scmp.ne.s32.totalorder %s98, %s100
      %p107 = scmp.eq.s32.totalorder %s31, 1
      %p108 = por %p106, %p107
      %p109 = scmp.ne.s32.totalorder %s100, %s101
      %p110 = scmp.eq.s32.totalorder %s31, 0
      %p111 = por %p109, %p110
      %p112 = scmp.ne.s32.totalorder %s100, %s101
      %p113 = scmp.eq.s32.totalorder %s32, 1
      %p114 = por %p112, %p113
      %p116 = scmp.ne.s32.totalorder %s101, %s115
      %p117 = scmp.eq.s32.totalorder %s32, 0
      %p118 = por %p116, %p117
      %s120 = sadd.s32 %s119, 1
      %p123 = scmp.eq.s32.totalorder %s26, 1
      %p124 = scmp.ne.s32.totalorder %s119, %s121
      %p125 = scmp.eq.s32.totalorder %s26, 0
      %p126 = por %p124, %p125
      %p127 = scmp.ne.s32.totalorder %s119, %s121
      %p128 = scmp.eq.s32.totalorder %s31, 1
      %p129 = por %p127, %p128
      %p130 = scmp.ne.s32.totalorder %s121, %s122
      %p131 = scmp.eq.s32.totalorder %s31, 0
      %p132 = por %p130, %p131
      %p133 = scmp.ne.s32.totalorder %s121, %s122
      %p134 = scmp.eq.s32.totalorder %s32, 1
      %p135 = por %p133, %p134
      %p137 = scmp.ne.s32.totalorder %s122, %s136
      %p138 = scmp.eq.s32.totalorder %s32, 0
      %p139 = por %p137, %p138
      %s140 = ssub.s32 %s34, %s41
      %p141 = scmp.eq.s32.totalorder %s140, 0
      %s143 = sadd.s32 %s142, 1
      %s144 = scalar_select %p141, %s142, %s143
      %p147 = pneg %p141
      %p148 = scmp.eq.s32.totalorder %s26, 1
      %p149 = por %p147, %p148
      %p150 = scmp.ne.s32.totalorder %s142, %s145
      %p151 = scmp.eq.s32.totalorder %s26, 0
      %p152 = por %p150, %p151
      %p153 = scmp.ne.s32.totalorder %s142, %s145
      %p154 = scmp.eq.s32.totalorder %s31, 1
      %p155 = por %p153, %p154
      %p156 = scmp.ne.s32.totalorder %s145, %s146
      %p157 = scmp.eq.s32.totalorder %s31, 0
      %p158 = por %p156, %p157
      %p159 = scmp.ne.s32.totalorder %s145, %s146
      %p160 = scmp.eq.s32.totalorder %s32, 1
      %p161 = por %p159, %p160
      %p163 = scmp.ne.s32.totalorder %s146, %s162
      %p164 = scmp.eq.s32.totalorder %s32, 0
      %p165 = por %p163, %p164
      %s166 = ssub.s32 %s34, %s41
      %p167 = scmp.eq.s32.totalorder %s166, 0
      %s169 = sadd.s32 %s168, 1
      %s170 = scalar_select %p167, %s168, %s169
      %p173 = pneg %p167
      %p174 = scmp.eq.s32.totalorder %s26, 1
      %p175 = por %p173, %p174
      %p176 = scmp.ne.s32.totalorder %s168, %s171
      %p177 = scmp.eq.s32.totalorder %s26, 0
      %p178 = por %p176, %p177
      %p179 = scmp.ne.s32.totalorder %s168, %s171
      %p180 = scmp.eq.s32.totalorder %s31, 1
      %p181 = por %p179, %p180
      %p182 = scmp.ne.s32.totalorder %s171, %s172
      %p183 = scmp.eq.s32.totalorder %s31, 0
      %p184 = por %p182, %p183
      %p185 = scmp.ne.s32.totalorder %s171, %s172
      %p186 = scmp.eq.s32.totalorder %s32, 1
      %p187 = por %p185, %p186
      %p189 = scmp.ne.s32.totalorder %s172, %s188
      %p190 = scmp.eq.s32.totalorder %s32, 0
      %p191 = por %p189, %p190
      %s192 = ssub.s32 %s33, %s45
      %s193 = ssub.s32 %s34, %s41
      %s194 = sor.u32 %s192, %s193
      %p195 = scmp.eq.s32.totalorder %s194, 0
      %s197 = sadd.s32 %s196, 1
      %s198 = scalar_select %p195, %s196, %s197
      %p201 = pneg %p195
      %p202 = scmp.eq.s32.totalorder %s26, 1
      %p203 = por %p201, %p202
      %p204 = scmp.ne.s32.totalorder %s196, %s199
      %p205 = scmp.eq.s32.totalorder %s26, 0
      %p206 = por %p204, %p205
      %p207 = scmp.ne.s32.totalorder %s196, %s199
      %p208 = scmp.eq.s32.totalorder %s31, 1
      %p209 = por %p207, %p208
      %p210 = scmp.ne.s32.totalorder %s199, %s200
      %p211 = scmp.eq.s32.totalorder %s31, 0
      %p212 = por %p210, %p211
      %p213 = scmp.ne.s32.totalorder %s199, %s200
      %p214 = scmp.eq.s32.totalorder %s32, 1
      %p215 = por %p213, %p214
      %p217 = scmp.ne.s32.totalorder %s200, %s216
      %p218 = scmp.eq.s32.totalorder %s32, 0
      %p219 = por %p217, %p218
      %s220 = ssub.s32 %s33, %s45
      %p221 = scmp.eq.s32.totalorder %s220, 0
      %s223 = sadd.s32 %s222, 1
      %s224 = scalar_select %p221, %s222, %s223
      %p227 = pneg %p221
      %p228 = scmp.eq.s32.totalorder %s26, 1
      %p229 = por %p227, %p228
      %p230 = scmp.ne.s32.totalorder %s222, %s225
      %p231 = scmp.eq.s32.totalorder %s26, 0
      %p232 = por %p230, %p231
      %p233 = scmp.ne.s32.totalorder %s222, %s225
      %p234 = scmp.eq.s32.totalorder %s31, 1
      %p235 = por %p233, %p234
      %p236 = scmp.ne.s32.totalorder %s225, %s226
      %p237 = scmp.eq.s32.totalorder %s31, 0
      %p238 = por %p236, %p237
      %p239 = scmp.ne.s32.totalorder %s225, %s226
      %p240 = scmp.eq.s32.totalorder %s32, 1
      %p241 = por %p239, %p240
      %p243 = scmp.ne.s32.totalorder %s226, %s242
      %p244 = scmp.eq.s32.totalorder %s32, 0
      %p245 = por %p243, %p244
      %p246 = scmp.le.s32.totalorder 1, %s26
      %p247 = scmp.lt.s32.totalorder %s26, 3
      %p248 = pnand %p246, %p247
      %p249 = pneg %p248
      // Predicated region
      $region9: #{tpu_custom_call.1} parent=5 // pred_check
        _
      $region10: #{tpu_custom_call.1} parent=5 // pred_check_branch
        %251 = sbr.rel (%p248) target = $region12
      $region11: #{tpu_custom_call.1} parent=5 // pred_region
        %s252 = ssub.s32 %s26, 1
        // Predicated region
        $region13: #{tpu_custom_call.1} parent=11 // pred_check
          %p253 = pneg %p111
        $region14: #{tpu_custom_call.1} parent=11 // pred_check_branch
          %255 = sbr.rel (%p253) target = $region16
        $region15: #{tpu_custom_call.1} parent=11 // pred_region
          _
        $region16: #{tpu_custom_call.1} parent=11 // pred_fallthru
          _
        // Predicated region
        $region17: #{tpu_custom_call.1} parent=11 // pred_check
          %p256 = pneg %p132
        $region18: #{tpu_custom_call.1} parent=11 // pred_check_branch
          %258 = sbr.rel (%p256) target = $region20
        $region19: #{tpu_custom_call.1} parent=11 // pred_region
          _
        $region20: #{tpu_custom_call.1} parent=11 // pred_fallthru
          _
        // Predicated region
        $region21: #{tpu_custom_call.1} parent=11 // pred_check
          %p259 = pneg %p158
        $region22: #{tpu_custom_call.1} parent=11 // pred_check_branch
          %261 = sbr.rel (%p259) target = $region24
        $region23: #{tpu_custom_call.1} parent=11 // pred_region
          %s263 = ssub.s32 1024, 1024
          %264 = vsyncadd [#allocation7], %s263
          %s265 = smul.addr %s36, 64
          %s266 = scalar_lea.hbm %s4, %s265
          %s267 = sshll.u32 [#allocation8], 4
          %s268 = int_to_ptr.vmem [resolvable:$true] %s267
          %273 = dma.hbm_to_vmem [thread:$0]  %s266, 1024, %s268, [#allocation7], 64, 64, 4
        $region24: #{tpu_custom_call.1} parent=11 // pred_fallthru
          _
        // Predicated region
        $region25: #{tpu_custom_call.1} parent=11 // pred_check
          %p274 = pneg %p184
        $region26: #{tpu_custom_call.1} parent=11 // pred_check_branch
          %276 = sbr.rel (%p274) target = $region28
        $region27: #{tpu_custom_call.1} parent=11 // pred_region
          %p277 = scmp.lt.s32.totalorder %s36, 0
          %s278 = scalar_select %p277, %s36, 0
          %s279 = scalar_lea.vmem %s5, %s278
        $region28: #{tpu_custom_call.1} parent=11 // pred_fallthru
          _
      $region12: #{tpu_custom_call.1} parent=5 // pred_fallthru
        _
      %p280 = scmp.lt.s32.totalorder %s26, 2
      // Predicated region
      $region29: #{tpu_custom_call.1} parent=5 // pred_check
        %p281 = pneg %p280
      $region30: #{tpu_custom_call.1} parent=5 // pred_check_branch
        %283 = sbr.rel (%p281) target = $region32
      $region31: #{tpu_custom_call.1} parent=5 // pred_region
        // Predicated region
        $region33: #{tpu_custom_call.1} parent=31 // pred_check
          %p284 = pneg %p58
        $region34: #{tpu_custom_call.1} parent=31 // pred_check_branch
          %286 = sbr.rel (%p284) target = $region36
        $region35: #{tpu_custom_call.1} parent=31 // pred_region
          %s287 = sand.u32 %s48, 1
          %s288 = scalar_lea.sflag [#allocation4], %s287
          %s289 = sand.u32 %s48, 1
          %s290 = smul.addr %s289, 8
          %s291 = scalar_lea.vmem [#allocation3], %s290
          %s293 = ssub.s32 128, 128
          %294 = vsyncadd %s288, %s293
          %s295 = smul.addr %s33, 128
          %s296 = scalar_lea.hbm %s0, %s295
          %s298 = sshll.u32 %s291, 4
          %s299 = int_to_ptr.vmem [resolvable:$true] %s298
          %301 = dma.hbm_to_vmem [thread:$0]  %s296, 128, %s299, %s288
        $region36: #{tpu_custom_call.1} parent=31 // pred_fallthru
          _
        // Predicated region
        $region37: #{tpu_custom_call.1} parent=31 // pred_check
          %p302 = pneg %p84
        $region38: #{tpu_custom_call.1} parent=31 // pred_check_branch
          %304 = sbr.rel (%p302) target = $region40
        $region39: #{tpu_custom_call.1} parent=31 // pred_region
          %s305 = sand.u32 %s26, 1
          %s306 = scalar_lea.sflag [#allocation7], %s305
          %s307 = sand.u32 %s74, 1
          %s308 = smul.addr %s307, 8
          %s309 = scalar_lea.vmem [#allocation6], %s308
          %s311 = ssub.s32 128, 128
          %312 = vsyncadd %s306, %s311
          %s313 = smul.addr %s33, 128
          %s314 = scalar_lea.hbm %s1, %s313
          %s316 = sshll.u32 %s309, 4
          %s317 = int_to_ptr.vmem [resolvable:$true] %s316
          %319 = dma.hbm_to_vmem [thread:$0]  %s314, 128, %s317, %s306
        $region40: #{tpu_custom_call.1} parent=31 // pred_fallthru
          _
      $region32: #{tpu_custom_call.1} parent=5 // pred_fallthru
        _
      %p320 = scmp.le.s32.totalorder 1, %s26
      %p321 = scmp.lt.s32.totalorder %s26, 3
      %p322 = pnand %p320, %p321
      %p323 = pneg %p322
      // Predicated region
      $region41: #{tpu_custom_call.1} parent=5 // pred_check
        _
      $region42: #{tpu_custom_call.1} parent=5 // pred_check_branch
        %325 = sbr.rel (%p322) target = $region44
      $region43: #{tpu_custom_call.1} parent=5 // pred_region
        %s326 = ssub.s32 %s26, 1
        %s327 = sand.u32 %s51, 1
        %s328 = scalar_lea.sflag [#allocation4], %s327
        %s329 = sand.u32 %s51, 1
        %s330 = smul.addr %s329, 8
        %s331 = scalar_lea.vmem [#allocation3], %s330
        // Predicated region
        $region45: #{tpu_custom_call.1} parent=43 // pred_check
          %p332 = pneg %p64
        $region46: #{tpu_custom_call.1} parent=43 // pred_check_branch
          %334 = sbr.rel (%p332) target = $region48
        $region47: #{tpu_custom_call.1} parent=43 // pred_region
          %335 = dma.done %s328, 128
        $region48: #{tpu_custom_call.1} parent=43 // pred_fallthru
          _
        %s336 = sand.u32 %s31, 1
        %s337 = scalar_lea.sflag [#allocation7], %s336
        %s338 = sand.u32 %s77, 1
        %s339 = smul.addr %s338, 8
        %s340 = scalar_lea.vmem [#allocation6], %s339
        // Predicated region
        $region49: #{tpu_custom_call.1} parent=43 // pred_check
          %p341 = pneg %p90
        $region50: #{tpu_custom_call.1} parent=43 // pred_check_branch
          %343 = sbr.rel (%p341) target = $region52
        $region51: #{tpu_custom_call.1} parent=43 // pred_region
          %344 = dma.done %s337, 128
        $region52: #{tpu_custom_call.1} parent=43 // pred_fallthru
          _
        // Predicated region
        $region53: #{tpu_custom_call.1} parent=43 // pred_check
          %p345 = pneg %p158
        $region54: #{tpu_custom_call.1} parent=43 // pred_check_branch
          %347 = sbr.rel (%p345) target = $region56
        $region55: #{tpu_custom_call.1} parent=43 // pred_region
          %348 = dma.done [#allocation7], 1024
        $region56: #{tpu_custom_call.1} parent=43 // pred_fallthru
          _
        %s349 = sand.u32 %s51, 1
        %s350 = scalar_lea.sflag [#allocation4], %s349
        %s351 = sand.u32 %s51, 1
        %s352 = smul.addr %s351, 8
        %s353 = scalar_lea.vmem [#allocation3], %s352
        %p354 = pneg %p64
        %p355 = pneg %p61
        %s356 = sand.u32 %s31, 1
        %s357 = scalar_lea.sflag [#allocation7], %s356
        %s358 = sand.u32 %s77, 1
        %s359 = smul.addr %s358, 8
        %s360 = scalar_lea.vmem [#allocation6], %s359
        %p361 = pneg %p90
        %p362 = pneg %p87
        %p363 = pneg %p111
        %p364 = pneg %p108
        %p365 = pneg %p132
        %p366 = pneg %p129
        %p367 = pneg %p158
        %p368 = pneg %p155
        %p369 = scmp.lt.s32.totalorder %s36, 0
        %s370 = scalar_select %p369, %s36, 0
        %s371 = scalar_lea.vmem %s5, %s370
        %p372 = pneg %p184
        %p373 = pneg %p181
        %p374 = pneg %p212
        %p375 = pneg %p209
        %s376 = sand.u32 %s199, 1
        %s377 = scalar_lea.sflag [#allocation5], %s376
        %s378 = sand.u32 %s199, 1
        %s379 = smul.addr %s378, 8
        %s380 = scalar_lea.vmem [#allocation9], %s379
        %p381 = pneg %p238
        %p382 = pneg %p235
        %s383 = sand.u32 %s225, 1
        %s384 = scalar_lea.sflag [#allocation11], %s383
        %s385 = sand.u32 %s225, 1
        %s386 = smul.addr %s385, 8
        %s387 = scalar_lea.vmem [#allocation10], %s386
        %p388 = scmp.lt.s32.totalorder %s36, 0
        %s389 = scalar_select %p388, %s36, 0
        %s390 = scalar_lea.vmem %s5, %s389
        %p392 = scmp.eq.s32.totalorder %s36, 0
        // Predicated region
        $region57: #{tpu_custom_call.1} parent=43 // pred_check
          %p393 = pneg %p392
        $region58: #{tpu_custom_call.1} parent=43 // pred_check_branch
          %395 = sbr.rel (%p393) target = $region60
        $region59: #{tpu_custom_call.1} parent=43 // pred_region
          %v396 = vld [vmem:[%s340] sm:$0xff]
          %v397 = vld [vmem:[%s331] sm:$0xff]
          %v398 = vadd.f32 %v396, %v397
          %399 = vadd.xlane.f32.xlu0 %v398
          %v400 = vpop.xlane.xlu0 %399
          %v401 = vrcp.pop 128.0
          %v402 = vmul.f32 %v400, %v401
          %v403 = vsub.f32 %v398, %v402
          %v404 = vmul.f32 %v403, %v403
          %405 = vadd.xlane.f32.xlu0 %v404
          %v406 = vpop.xlane.xlu0 %405
          %v407 = vmul.f32 %v406, %v401
          %v408 = vadd.f32 %v407, 1e-05
          %v409 = vrsqrt.pop %v408
          %v410 = vmul.f32 %v403, %v409
          %v411 = vld [vmem:[%s2] sm:$0x1]
          %v413 = vlaneseq
          %v414 = vshrl.u32 %v413, 7
          %v415 = vsub.s32 0, %v414
          %v416 = vrot.slane %v411, %v415
          %v418 = vmul.f32 %v410, %v416
          %v419 = vld [vmem:[%s3] sm:$0x1]
          %v421 = vlaneseq
          %v422 = vshrl.u32 %v421, 7
          %v423 = vsub.s32 0, %v422
          %v424 = vrot.slane %v419, %v423
          %v426 = vadd.f32 %v418, %v424
          %427 = vst [vmem:[#allocation2] sm:$0xff] %v426
          %428 = vst [vmem:[%s387] sm:$0xff] %v398
        $region60: #{tpu_custom_call.1} parent=43 // pred_fallthru
          _
        %v429 = vld [vmem:[#allocation2] sm:$0xff]
        %v430 = vpack.c.bf16 %v429, %v429
        %v431 = vld [vmem:[#allocation8] sm:$0xf]
        %v432 = vld [vmem:[#allocation8 + $0x4] sm:$0xf]
        %v433 = vld [vmem:[#allocation8 + $0x8] sm:$0xf]
        %v434 = vld [vmem:[#allocation8 + $0xc] sm:$0xf]
        %v435 = vld [vmem:[#allocation8 + $0x10] sm:$0xf]
        %v436 = vld [vmem:[#allocation8 + $0x14] sm:$0xf]
        %v437 = vld [vmem:[#allocation8 + $0x18] sm:$0xf]
        %v438 = vld [vmem:[#allocation8 + $0x1c] sm:$0xf]
        %v439 = vld [vmem:[#allocation8 + $0x20] sm:$0xf]
        %v440 = vld [vmem:[#allocation8 + $0x24] sm:$0xf]
        %v441 = vld [vmem:[#allocation8 + $0x28] sm:$0xf]
        %v442 = vld [vmem:[#allocation8 + $0x2c] sm:$0xf]
        %v443 = vld [vmem:[#allocation8 + $0x30] sm:$0xf]
        %v444 = vld [vmem:[#allocation8 + $0x34] sm:$0xf]
        %v445 = vld [vmem:[#allocation8 + $0x38] sm:$0xf]
        %v446 = vld [vmem:[#allocation8 + $0x3c] sm:$0xf]
        %v447 = vld [vmem:[%s390] sm:$0x1]
        %v449 = vlaneseq
        %v450 = vshrl.u32 %v449, 7
        %v451 = vsub.s32 0, %v450
        %v452 = vrot.slane %v447, %v451
        %v470 = vunpack.c.l.b16 %v431
        %v471 = vunpack.c.l.b16 %v432
        %v472 = vunpack.c.l.b16 %v433
        %v473 = vunpack.c.l.b16 %v434
        %v474 = vunpack.c.l.b16 %v435
        %v475 = vunpack.c.l.b16 %v436
        %v476 = vunpack.c.l.b16 %v437
        %v477 = vunpack.c.l.b16 %v438
        %v478 = vunpack.c.l.b16 %v439
        %v479 = vunpack.c.l.b16 %v440
        %v480 = vunpack.c.l.b16 %v441
        %v481 = vunpack.c.l.b16 %v442
        %v482 = vunpack.c.l.b16 %v443
        %v483 = vunpack.c.l.b16 %v444
        %v484 = vunpack.c.l.b16 %v445
        %v485 = vunpack.c.l.b16 %v446
        %v486 = vpack.c.b16 %v471, %v470
        %v487 = vpack.c.b16 %v473, %v472
        %v488 = vpack.c.b16 %v475, %v474
        %v489 = vpack.c.b16 %v477, %v476
        %v490 = vpack.c.b16 %v479, %v478
        %v491 = vpack.c.b16 %v481, %v480
        %v492 = vpack.c.b16 %v483, %v482
        %v493 = vpack.c.b16 %v485, %v484
        %502 = vmatprep.subr.bf16.mxu0 0
        %503 = vmatpush1.bf16.msra.mxu0 %v486
        %504 = vmatprep.subr.bf16.mxu0 0
        %505 = vmatpush1.bf16.msra.mxu0 %v487
        %506 = vmatprep.subr.bf16.mxu0 0
        %507 = vmatpush1.bf16.msra.mxu0 %v488
        %508 = vmatprep.subr.bf16.mxu0 0
        %509 = vmatpush1.bf16.msra.mxu0 %v489
        %510 = vmatprep.subr.bf16.mxu0 0
        %511 = vmatpush1.bf16.msra.mxu0 %v490
        %512 = vmatprep.subr.bf16.mxu0 0
        %513 = vmatpush1.bf16.msra.mxu0 %v491
        %514 = vmatprep.subr.bf16.mxu0 0
        %515 = vmatpush1.bf16.msra.mxu0 %v492
        %516 = vmatprep.subr.bf16.mxu0 0
        %517 = vmatpush1.bf16.msra.mxu0 %v493
        %518 = vmatprep.subr.bf16.mxu0 0
        %519 = vmatpush1.bf16.msra.mxu0 0
        %520 = vmatprep.subr.bf16.mxu0 0
        %521 = vmatpush1.bf16.msra.mxu0 0
        %522 = vmatprep.subr.bf16.mxu0 0
        %523 = vmatpush1.bf16.msra.mxu0 0
        %524 = vmatprep.subr.bf16.mxu0 0
        %525 = vmatpush1.bf16.msra.mxu0 0
        %526 = vmatprep.subr.bf16.mxu0 0
        %527 = vmatpush1.bf16.msra.mxu0 0
        %528 = vmatprep.subr.bf16.mxu0 0
        %529 = vmatpush1.bf16.msra.mxu0 0
        %530 = vmatprep.subr.bf16.mxu0 0
        %531 = vmatpush1.bf16.msra.mxu0 0
        %532 = vmatprep.subr.bf16.mxu0 0
        %533 = vmatpush1.bf16.msra.mxu0 0
        %534 = vmatprep.mubr.bf16.mxu0 0
        %535 = vmatmul.mubr.bf16.gmra.mrb[0].mxu0 %v430
        %v536 = vpop.f32.mrb[0].mxu0
        %v537 = vadd.f32 %v452, %v536
        %v538 = vpop.f32.mrb[0].mxu0
        %v539 = vpop.f32.mrb[0].mxu0
        %v540 = vpop.f32.mrb[0].mxu0
        %541 = vdwg.mxu0
        %542 = vst [vmem:[%s380] sm:$0xff] %v537
        %s543 = sand.u32 %s199, 1
        %s544 = scalar_lea.sflag [#allocation5], %s543
        %s545 = sand.u32 %s199, 1
        %s546 = smul.addr %s545, 8
        %s547 = scalar_lea.vmem [#allocation9], %s546
        %s548 = sand.u32 %s225, 1
        %s549 = scalar_lea.sflag [#allocation11], %s548
        %s550 = sand.u32 %s225, 1
        %s551 = smul.addr %s550, 8
        %s552 = scalar_lea.vmem [#allocation10], %s551
        // Predicated region
        $region61: #{tpu_custom_call.1} parent=43 // pred_check
          %p553 = pneg %p209
        $region62: #{tpu_custom_call.1} parent=43 // pred_check_branch
          %555 = sbr.rel (%p553) target = $region64
        $region63: #{tpu_custom_call.1} parent=43 // pred_region
          %s557 = ssub.s32 128, 128
          %558 = vsyncadd %s544, %s557
          %s559 = sadd.s32 %s36, %s35
          %s560 = smul.addr %s559, 128
          %s561 = scalar_lea.hbm %s6, %s560
          %s563 = sshll.u32 %s547, 4
          %s564 = int_to_ptr.vmem [resolvable:$true] %s563
          %566 = dma.vmem_to_hbm [thread:$0]  %s564, 128, %s561, %s544
        $region64: #{tpu_custom_call.1} parent=43 // pred_fallthru
          _
        // Predicated region
        $region65: #{tpu_custom_call.1} parent=43 // pred_check
          %p567 = pneg %p235
        $region66: #{tpu_custom_call.1} parent=43 // pred_check_branch
          %569 = sbr.rel (%p567) target = $region68
        $region67: #{tpu_custom_call.1} parent=43 // pred_region
          %s571 = ssub.s32 128, 128
          %572 = vsyncadd %s549, %s571
          %s573 = smul.addr %s35, 128
          %s574 = scalar_lea.hbm %s7, %s573
          %s576 = sshll.u32 %s552, 4
          %s577 = int_to_ptr.vmem [resolvable:$true] %s576
          %579 = dma.vmem_to_hbm [thread:$0]  %s577, 128, %s574, %s549
        $region68: #{tpu_custom_call.1} parent=43 // pred_fallthru
          _
      $region44: #{tpu_custom_call.1} parent=5 // pred_fallthru
        _
      %p580 = scmp.le.s32.totalorder 2, %s26
      // Predicated region
      $region69: #{tpu_custom_call.1} parent=5 // pred_check
        %p581 = pneg %p580
      $region70: #{tpu_custom_call.1} parent=5 // pred_check_branch
        %583 = sbr.rel (%p581) target = $region72
      $region71: #{tpu_custom_call.1} parent=5 // pred_region
        %s584 = ssub.s32 %s26, 2
        // Predicated region
        $region73: #{tpu_custom_call.1} parent=71 // pred_check
          %p585 = pneg %p215
        $region74: #{tpu_custom_call.1} parent=71 // pred_check_branch
          %587 = sbr.rel (%p585) target = $region76
        $region75: #{tpu_custom_call.1} parent=71 // pred_region
          %s588 = sand.u32 %s200, 1
          %s589 = scalar_lea.sflag [#allocation5], %s588
          %s590 = sand.u32 %s200, 1
          %s591 = smul.addr %s590, 8
          %s592 = scalar_lea.vmem [#allocation9], %s591
          %593 = dma.done %s589, 128
        $region76: #{tpu_custom_call.1} parent=71 // pred_fallthru
          _
        // Predicated region
        $region77: #{tpu_custom_call.1} parent=71 // pred_check
          %p594 = pneg %p241
        $region78: #{tpu_custom_call.1} parent=71 // pred_check_branch
          %596 = sbr.rel (%p594) target = $region80
        $region79: #{tpu_custom_call.1} parent=71 // pred_region
          %s597 = sand.u32 %s226, 1
          %s598 = scalar_lea.sflag [#allocation11], %s597
          %s599 = sand.u32 %s226, 1
          %s600 = smul.addr %s599, 8
          %s601 = scalar_lea.vmem [#allocation10], %s600
          %602 = dma.done %s598, 128
        $region80: #{tpu_custom_call.1} parent=71 // pred_fallthru
          _
      $region72: #{tpu_custom_call.1} parent=5 // pred_fallthru
        _
    $region6: #{tpu_custom_call.1} parent=1 // loop_footer
      %s30 = sadd.s32 1, %s26
    $region7: #{tpu_custom_call.1} parent=1 // loop_footer_branch
      %25 = sbr.rel target = $region3
    $region8: #{tpu_custom_call.1} parent=1 // loop_exit
      _
    %603 = vsyncpa [#allocation4], 1
    %s604 = scalar_lea.sflag [#allocation4], 1
    %605 = vsyncpa %s604, 1
    %606 = vsyncpa [#allocation7], 1
    %s607 = scalar_lea.sflag [#allocation7], 1
    %608 = vsyncpa %s607, 1
    %609 = vsyncpa [#allocation5], 1
    %s610 = scalar_lea.sflag [#allocation5], 1
    %611 = vsyncpa %s610, 1
    %612 = vsyncpa [#allocation11], 1
    %s613 = scalar_lea.sflag [#allocation11], 1
    %614 = vsyncpa %s613, 1

// kernel: tpu_custom_call.1
$region0: #{tpu_custom_call.1}
  #allocation0 [shape = 'u32[]', space=smem, size = 0x4, offset = 0x4, fixed_abs, tag = 'smem constant byte address 0x4 - core index']
  #allocation1 [shape = 'u32[144,128]{1,0:T(1,128)}', space=vmem, size = 0x12000, scoped, tag = 'internal scratch']
  #allocation2 [shape = 'f32[8,128]{1,0:T(8,128)}', space=vmem, size = 0x1000, scoped, tag = 'scratch operand']
  %s0 = inlined_call_operand.hbm [shape: f32[16,128], index: 0, kind: input, shape index: {}]
  %s1 = inlined_call_operand.hbm [shape: f32[16,128], index: 1, kind: input, shape index: {}]
  %s2 = inlined_call_operand.vmem [shape: f32[1,128], index: 2, kind: input, shape index: {}]
  %s3 = inlined_call_operand.vmem [shape: f32[1,128], index: 3, kind: input, shape index: {}]
  %s4 = inlined_call_operand.hbm [shape: bf16[128,128], index: 4, kind: input, shape index: {}]
  %s5 = inlined_call_operand.vmem [shape: f32[1,128], index: 5, kind: input, shape index: {}]
  %s6 = inlined_call_operand.hbm [shape: f32[16,128], index: 6, kind: output, shape index: {0}]
  %s7 = inlined_call_operand.hbm [shape: f32[16,128], index: 7, kind: output, shape index: {1}]
  %8 = xla_tuple %s6, %s7
  %s9 = sld [smem:[#allocation0]]
  $region81: #{tpu_custom_call.1} parent=0
    _
  %s11 = ssub.s32 1, %s9
  %s12 = scalar_select 0, %s11, %s9
  $region1: #{tpu_custom_call.1} parent=0
    #allocation3 [shape = 'u8[8192]{0}', space=vmem, size = 0x2000, scoped, tag = 'input window, operand 0']
    #allocation4 [shape = 's32[2]{0}', space=sflag, size = 0x8, scoped, tag = 'scoped memory for tpu_custom_call.1']
    #allocation5 [shape = 's32[2]{0}', space=sflag, size = 0x8, scoped, tag = 'scoped memory for tpu_custom_call.1']
    #allocation6 [shape = 'u8[8192]{0}', space=vmem, size = 0x2000, scoped, tag = 'input window, operand 1']
    #allocation7 [shape = 's32[2]{0}', space=sflag, size = 0x8, scoped, tag = 'scoped memory for tpu_custom_call.1']
    #allocation8 [shape = 'u8[32768]{0}', space=vmem, size = 0x8000, scoped, tag = 'input window, operand 4, single buffered']
    #allocation9 [shape = 'u8[8192]{0}', space=vmem, size = 0x2000, scoped, tag = 'output window, operand 0']
    #allocation10 [shape = 'u8[8192]{0}', space=vmem, size = 0x2000, scoped, tag = 'output window, operand 1']
    #allocation11 [shape = 's32[2]{0}', space=sflag, size = 0x8, scoped, tag = 'scoped memory for tpu_custom_call.1']
    %13 = vsyncpa [#allocation4], 0
    %s14 = scalar_lea.sflag [#allocation4], 1
    %15 = vsyncpa %s14, 0
    %16 = vsyncpa [#allocation7], 0
    %s17 = scalar_lea.sflag [#allocation7], 1
    %18 = vsyncpa %s17, 0
    %19 = vsyncpa [#allocation5], 0
    %s20 = scalar_lea.sflag [#allocation5], 1
    %21 = vsyncpa %s20, 0
    %22 = vsyncpa [#allocation11], 0
    %s23 = scalar_lea.sflag [#allocation11], 1
    %24 = vsyncpa %s23, 0
    loop: start=0, step=1, limit=4
    $region2: #{tpu_custom_call.1} parent=1 // loop_pre_header
      _
    $region3: #{tpu_custom_call.1} parent=1 // loop_header
      %s26 = sphi 0, %s30
      %p27 = scmp.ge.s32.totalorder %s26, 4
      %s33 = sphi 0, %s45
      %s34 = sphi 0, %s41
      %s35 = sphi 0, %s33
      %s36 = sphi 0, %s34
      %s37 = sphi 0, %s35
      %s38 = sphi 0, %s36
      %s48 = sphi 0, %s50
      %s51 = sphi 0, %s48
      %s52 = sphi 0, %s51
      %s68 = sphi 0, %s52
      %s74 = sphi 0, %s76
      %s77 = sphi 0, %s74
      %s78 = sphi 0, %s77
      %s94 = sphi 0, %s78
      %s98 = sphi 0, %s98
      %s100 = sphi 0, %s98
      %s101 = sphi 0, %s100
      %s115 = sphi 0, %s101
      %s119 = sphi 0, %s119
      %s121 = sphi 0, %s119
      %s122 = sphi 0, %s121
      %s136 = sphi 0, %s122
      %s142 = sphi 0, %s144
      %s145 = sphi 0, %s142
      %s146 = sphi 0, %s145
      %s162 = sphi 0, %s146
      %s168 = sphi 0, %s170
      %s171 = sphi 0, %s168
      %s172 = sphi 0, %s171
      %s188 = sphi 0, %s172
      %s196 = sphi 0, %s198
      %s199 = sphi 0, %s196
      %s200 = sphi 0, %s199
      %s216 = sphi 0, %s200
      %s222 = sphi 0, %s224
      %s225 = sphi 0, %s222
      %s226 = sphi 0, %s225
      %s242 = sphi 0, %s226
    $region4: #{tpu_custom_call.1} parent=1 // loop_header_branch
      %29 = sbr.rel (%p27) target = $region8
    $region5: #{tpu_custom_call.1} parent=1 // loop_body
      %s31 = ssub.s32 %s26, 1
      %s32 = ssub.s32 %s26, 2
      %s39 = sadd.s32 1, %s34
      %p40 = scmp.ge.s32.totalorder %s39, 1
      %s41 = scalar_select %p40, 0, %s39
      %s42 = sadd.s32 1, %s33
      %s43 = scalar_select %p40, %s42, %s33
      %p44 = scmp.ge.s32.totalorder %s43, 2
      %s45 = scalar_select %p44, 0, %s43
      %s46 = ssub.s32 %s33, %s45
      %p47 = scmp.eq.s32.totalorder %s46, 0
      %s49 = sadd.s32 %s48, 1
      %s50 = scalar_select %p47, %s48, %s49
      %p53 = pneg %p47
      %p54 = scmp.eq.s32.totalorder %s26, 1
      %p55 = por %p53, %p54
      %p56 = scmp.ne.s32.totalorder %s48, %s51
      %p57 = scmp.eq.s32.totalorder %s26, 0
      %p58 = por %p56, %p57
      %p59 = scmp.ne.s32.totalorder %s48, %s51
      %p60 = scmp.eq.s32.totalorder %s31, 1
      %p61 = por %p59, %p60
      %p62 = scmp.ne.s32.totalorder %s51, %s52
      %p63 = scmp.eq.s32.totalorder %s31, 0
      %p64 = por %p62, %p63
      %p65 = scmp.ne.s32.totalorder %s51, %s52
      %p66 = scmp.eq.s32.totalorder %s32, 1
      %p67 = por %p65, %p66
      %p69 = scmp.ne.s32.totalorder %s52, %s68
      %p70 = scmp.eq.s32.totalorder %s32, 0
      %p71 = por %p69, %p70
      %s72 = ssub.s32 %s33, %s45
      %p73 = scmp.eq.s32.totalorder %s72, 0
      %s75 = sadd.s32 %s74, 1
      %s76 = scalar_select %p73, %s74, %s75
      %p79 = pneg %p73
      %p80 = scmp.eq.s32.totalorder %s26, 1
      %p81 = por %p79, %p80
      %p82 = scmp.ne.s32.totalorder %s74, %s77
      %p83 = scmp.eq.s32.totalorder %s26, 0
      %p84 = por %p82, %p83
      %p85 = scmp.ne.s32.totalorder %s74, %s77
      %p86 = scmp.eq.s32.totalorder %s31, 1
      %p87 = por %p85, %p86
      %p88 = scmp.ne.s32.totalorder %s77, %s78
      %p89 = scmp.eq.s32.totalorder %s31, 0
      %p90 = por %p88, %p89
      %p91 = scmp.ne.s32.totalorder %s77, %s78
      %p92 = scmp.eq.s32.totalorder %s32, 1
      %p93 = por %p91, %p92
      %p95 = scmp.ne.s32.totalorder %s78, %s94
      %p96 = scmp.eq.s32.totalorder %s32, 0
      %p97 = por %p95, %p96
      %s99 = sadd.s32 %s98, 1
      %p102 = scmp.eq.s32.totalorder %s26, 1
      %p103 = scmp.ne.s32.totalorder %s98, %s100
      %p104 = scmp.eq.s32.totalorder %s26, 0
      %p105 = por %p103, %p104
      %p106 = scmp.ne.s32.totalorder %s98, %s100
      %p107 = scmp.eq.s32.totalorder %s31, 1
      %p108 = por %p106, %p107
      %p109 = scmp.ne.s32.totalorder %s100, %s101
      %p110 = scmp.eq.s32.totalorder %s31, 0
      %p111 = por %p109, %p110
      %p112 = scmp.ne.s32.totalorder %s100, %s101
      %p113 = scmp.eq.s32.totalorder %s32, 1
      %p114 = por %p112, %p113
      %p116 = scmp.ne.s32.totalorder %s101, %s115
      %p117 = scmp.eq.s32.totalorder %s32, 0
      %p118 = por %p116, %p117
      %s120 = sadd.s32 %s119, 1
      %p123 = scmp.eq.s32.totalorder %s26, 1
      %p124 = scmp.ne.s32.totalorder %s119, %s121
      %p125 = scmp.eq.s32.totalorder %s26, 0
      %p126 = por %p124, %p125
      %p127 = scmp.ne.s32.totalorder %s119, %s121
      %p128 = scmp.eq.s32.totalorder %s31, 1
      %p129 = por %p127, %p128
      %p130 = scmp.ne.s32.totalorder %s121, %s122
      %p131 = scmp.eq.s32.totalorder %s31, 0
      %p132 = por %p130, %p131
      %p133 = scmp.ne.s32.totalorder %s121, %s122
      %p134 = scmp.eq.s32.totalorder %s32, 1
      %p135 = por %p133, %p134
      %p137 = scmp.ne.s32.totalorder %s122, %s136
      %p138 = scmp.eq.s32.totalorder %s32, 0
      %p139 = por %p137, %p138
      %s140 = ssub.s32 %s34, %s41
      %p141 = scmp.eq.s32.totalorder %s140, 0
      %s143 = sadd.s32 %s142, 1
      %s144 = scalar_select %p141, %s142, %s143
      %p147 = pneg %p141
      %p148 = scmp.eq.s32.totalorder %s26, 1
      %p149 = por %p147, %p148
      %p150 = scmp.ne.s32.totalorder %s142, %s145
      %p151 = scmp.eq.s32.totalorder %s26, 0
      %p152 = por %p150, %p151
      %p153 = scmp.ne.s32.totalorder %s142, %s145
      %p154 = scmp.eq.s32.totalorder %s31, 1
      %p155 = por %p153, %p154
      %p156 = scmp.ne.s32.totalorder %s145, %s146
      %p157 = scmp.eq.s32.totalorder %s31, 0
      %p158 = por %p156, %p157
      %p159 = scmp.ne.s32.totalorder %s145, %s146
      %p160 = scmp.eq.s32.totalorder %s32, 1
      %p161 = por %p159, %p160
      %p163 = scmp.ne.s32.totalorder %s146, %s162
      %p164 = scmp.eq.s32.totalorder %s32, 0
      %p165 = por %p163, %p164
      %s166 = ssub.s32 %s34, %s41
      %p167 = scmp.eq.s32.totalorder %s166, 0
      %s169 = sadd.s32 %s168, 1
      %s170 = scalar_select %p167, %s168, %s169
      %p173 = pneg %p167
      %p174 = scmp.eq.s32.totalorder %s26, 1
      %p175 = por %p173, %p174
      %p176 = scmp.ne.s32.totalorder %s168, %s171
      %p177 = scmp.eq.s32.totalorder %s26, 0
      %p178 = por %p176, %p177
      %p179 = scmp.ne.s32.totalorder %s168, %s171
      %p180 = scmp.eq.s32.totalorder %s31, 1
      %p181 = por %p179, %p180
      %p182 = scmp.ne.s32.totalorder %s171, %s172
      %p183 = scmp.eq.s32.totalorder %s31, 0
      %p184 = por %p182, %p183
      %p185 = scmp.ne.s32.totalorder %s171, %s172
      %p186 = scmp.eq.s32.totalorder %s32, 1
      %p187 = por %p185, %p186
      %p189 = scmp.ne.s32.totalorder %s172, %s188
      %p190 = scmp.eq.s32.totalorder %s32, 0
      %p191 = por %p189, %p190
      %s192 = ssub.s32 %s33, %s45
      %s193 = ssub.s32 %s34, %s41
      %s194 = sor.u32 %s192, %s193
      %p195 = scmp.eq.s32.totalorder %s194, 0
      %s197 = sadd.s32 %s196, 1
      %s198 = scalar_select %p195, %s196, %s197
      %p201 = pneg %p195
      %p202 = scmp.eq.s32.totalorder %s26, 1
      %p203 = por %p201, %p202
      %p204 = scmp.ne.s32.totalorder %s196, %s199
      %p205 = scmp.eq.s32.totalorder %s26, 0
      %p206 = por %p204, %p205
      %p207 = scmp.ne.s32.totalorder %s196, %s199
      %p208 = scmp.eq.s32.totalorder %s31, 1
      %p209 = por %p207, %p208
      %p210 = scmp.ne.s32.totalorder %s199, %s200
      %p211 = scmp.eq.s32.totalorder %s31, 0
      %p212 = por %p210, %p211
      %p213 = scmp.ne.s32.totalorder %s199, %s200
      %p214 = scmp.eq.s32.totalorder %s32, 1
      %p215 = por %p213, %p214
      %p217 = scmp.ne.s32.totalorder %s200, %s216
      %p218 = scmp.eq.s32.totalorder %s32, 0
      %p219 = por %p217, %p218
      %s220 = ssub.s32 %s33, %s45
      %p221 = scmp.eq.s32.totalorder %s220, 0
      %s223 = sadd.s32 %s222, 1
      %s224 = scalar_select %p221, %s222, %s223
      %p227 = pneg %p221
      %p228 = scmp.eq.s32.totalorder %s26, 1
      %p229 = por %p227, %p228
      %p230 = scmp.ne.s32.totalorder %s222, %s225
      %p231 = scmp.eq.s32.totalorder %s26, 0
      %p232 = por %p230, %p231
      %p233 = scmp.ne.s32.totalorder %s222, %s225
      %p234 = scmp.eq.s32.totalorder %s31, 1
      %p235 = por %p233, %p234
      %p236 = scmp.ne.s32.totalorder %s225, %s226
      %p237 = scmp.eq.s32.totalorder %s31, 0
      %p238 = por %p236, %p237
      %p239 = scmp.ne.s32.totalorder %s225, %s226
      %p240 = scmp.eq.s32.totalorder %s32, 1
      %p241 = por %p239, %p240
      %p243 = scmp.ne.s32.totalorder %s226, %s242
      %p244 = scmp.eq.s32.totalorder %s32, 0
      %p245 = por %p243, %p244
      %p246 = scmp.le.s32.totalorder 1, %s26
      %p247 = scmp.lt.s32.totalorder %s26, 3
      %p248 = pnand %p246, %p247
      %p249 = pneg %p248
      // Predicated region
      $region9: #{tpu_custom_call.1} parent=5 // pred_check
        _
      $region10: #{tpu_custom_call.1} parent=5 // pred_check_branch
        %251 = sbr.rel (%p248) target = $region12
      $region11: #{tpu_custom_call.1} parent=5 // pred_region
        %s252 = ssub.s32 %s26, 1
        // Predicated region
        $region13: #{tpu_custom_call.1} parent=11 // pred_check
          %p253 = pneg %p111
        $region14: #{tpu_custom_call.1} parent=11 // pred_check_branch
          %255 = sbr.rel (%p253) target = $region16
        $region15: #{tpu_custom_call.1} parent=11 // pred_region
          _
        $region16: #{tpu_custom_call.1} parent=11 // pred_fallthru
          _
        // Predicated region
        $region17: #{tpu_custom_call.1} parent=11 // pred_check
          %p256 = pneg %p132
        $region18: #{tpu_custom_call.1} parent=11 // pred_check_branch
          %258 = sbr.rel (%p256) target = $region20
        $region19: #{tpu_custom_call.1} parent=11 // pred_region
          _
        $region20: #{tpu_custom_call.1} parent=11 // pred_fallthru
          _
        // Predicated region
        $region21: #{tpu_custom_call.1} parent=11 // pred_check
          %p259 = pneg %p158
        $region22: #{tpu_custom_call.1} parent=11 // pred_check_branch
          %261 = sbr.rel (%p259) target = $region24
        $region23: #{tpu_custom_call.1} parent=11 // pred_region
          %s263 = ssub.s32 1024, 1024
          %264 = vsyncadd [#allocation7], %s263
          %s265 = smul.addr %s36, 64
          %s266 = scalar_lea.hbm %s4, %s265
          %s267 = sshll.u32 [#allocation8], 4
          %s268 = int_to_ptr.vmem [resolvable:$true] %s267
          %273 = dma.hbm_to_vmem [thread:$0]  %s266, 1024, %s268, [#allocation7], 64, 64, 4
        $region24: #{tpu_custom_call.1} parent=11 // pred_fallthru
          _
        // Predicated region
        $region25: #{tpu_custom_call.1} parent=11 // pred_check
          %p274 = pneg %p184
        $region26: #{tpu_custom_call.1} parent=11 // pred_check_branch
          %276 = sbr.rel (%p274) target = $region28
        $region27: #{tpu_custom_call.1} parent=11 // pred_region
          %p277 = scmp.lt.s32.totalorder %s36, 0
          %s278 = scalar_select %p277, %s36, 0
          %s279 = scalar_lea.vmem %s5, %s278
        $region28: #{tpu_custom_call.1} parent=11 // pred_fallthru
          _
      $region12: #{tpu_custom_call.1} parent=5 // pred_fallthru
        _
      %p280 = scmp.lt.s32.totalorder %s26, 2
      // Predicated region
      $region29: #{tpu_custom_call.1} parent=5 // pred_check
        %p281 = pneg %p280
      $region30: #{tpu_custom_call.1} parent=5 // pred_check_branch
        %283 = sbr.rel (%p281) target = $region32
      $region31: #{tpu_custom_call.1} parent=5 // pred_region
        // Predicated region
        $region33: #{tpu_custom_call.1} parent=31 // pred_check
          %p284 = pneg %p58
        $region34: #{tpu_custom_call.1} parent=31 // pred_check_branch
          %286 = sbr.rel (%p284) target = $region36
        $region35: #{tpu_custom_call.1} parent=31 // pred_region
          %s287 = sand.u32 %s48, 1
          %s288 = scalar_lea.sflag [#allocation4], %s287
          %s289 = sand.u32 %s48, 1
          %s290 = smul.addr %s289, 8
          %s291 = scalar_lea.vmem [#allocation3], %s290
          %s293 = ssub.s32 128, 128
          %294 = vsyncadd %s288, %s293
          %s295 = smul.addr %s33, 128
          %s296 = scalar_lea.hbm %s0, %s295
          %s298 = sshll.u32 %s291, 4
          %s299 = int_to_ptr.vmem [resolvable:$true] %s298
          %301 = dma.hbm_to_vmem [thread:$0]  %s296, 128, %s299, %s288
        $region36: #{tpu_custom_call.1} parent=31 // pred_fallthru
          _
        // Predicated region
        $region37: #{tpu_custom_call.1} parent=31 // pred_check
          %p302 = pneg %p84
        $region38: #{tpu_custom_call.1} parent=31 // pred_check_branch
          %304 = sbr.rel (%p302) target = $region40
        $region39: #{tpu_custom_call.1} parent=31 // pred_region
          %s305 = sand.u32 %s26, 1
          %s306 = scalar_lea.sflag [#allocation7], %s305
          %s307 = sand.u32 %s74, 1
          %s308 = smul.addr %s307, 8
          %s309 = scalar_lea.vmem [#allocation6], %s308
          %s311 = ssub.s32 128, 128
          %312 = vsyncadd %s306, %s311
          %s313 = smul.addr %s33, 128
          %s314 = scalar_lea.hbm %s1, %s313
          %s316 = sshll.u32 %s309, 4
          %s317 = int_to_ptr.vmem [resolvable:$true] %s316
          %319 = dma.hbm_to_vmem [thread:$0]  %s314, 128, %s317, %s306
        $region40: #{tpu_custom_call.1} parent=31 // pred_fallthru
          _
      $region32: #{tpu_custom_call.1} parent=5 // pred_fallthru
        _
      %p320 = scmp.le.s32.totalorder 1, %s26
      %p321 = scmp.lt.s32.totalorder %s26, 3
      %p322 = pnand %p320, %p321
      %p323 = pneg %p322
      // Predicated region
      $region41: #{tpu_custom_call.1} parent=5 // pred_check
        _
      $region42: #{tpu_custom_call.1} parent=5 // pred_check_branch
        %325 = sbr.rel (%p322) target = $region44
      $region43: #{tpu_custom_call.1} parent=5 // pred_region
        %s326 = ssub.s32 %s26, 1
        %s327 = sand.u32 %s51, 1
        %s328 = scalar_lea.sflag [#allocation4], %s327
        %s329 = sand.u32 %s51, 1
        %s330 = smul.addr %s329, 8
        %s331 = scalar_lea.vmem [#allocation3], %s330
        // Predicated region
        $region45: #{tpu_custom_call.1} parent=43 // pred_check
          %p332 = pneg %p64
        $region46: #{tpu_custom_call.1} parent=43 // pred_check_branch
          %334 = sbr.rel (%p332) target = $region48
        $region47: #{tpu_custom_call.1} parent=43 // pred_region
          %335 = dma.done %s328, 128
        $region48: #{tpu_custom_call.1} parent=43 // pred_fallthru
          _
        %s336 = sand.u32 %s31, 1
        %s337 = scalar_lea.sflag [#allocation7], %s336
        %s338 = sand.u32 %s77, 1
        %s339 = smul.addr %s338, 8
        %s340 = scalar_lea.vmem [#allocation6], %s339
        // Predicated region
        $region49: #{tpu_custom_call.1} parent=43 // pred_check
          %p341 = pneg %p90
        $region50: #{tpu_custom_call.1} parent=43 // pred_check_branch
          %343 = sbr.rel (%p341) target = $region52
        $region51: #{tpu_custom_call.1} parent=43 // pred_region
          %344 = dma.done %s337, 128
        $region52: #{tpu_custom_call.1} parent=43 // pred_fallthru
          _
        // Predicated region
        $region53: #{tpu_custom_call.1} parent=43 // pred_check
          %p345 = pneg %p158
        $region54: #{tpu_custom_call.1} parent=43 // pred_check_branch
          %347 = sbr.rel (%p345) target = $region56
        $region55: #{tpu_custom_call.1} parent=43 // pred_region
          %348 = dma.done [#allocation7], 1024
        $region56: #{tpu_custom_call.1} parent=43 // pred_fallthru
          _
        %s349 = sand.u32 %s51, 1
        %s350 = scalar_lea.sflag [#allocation4], %s349
        %s351 = sand.u32 %s51, 1
        %s352 = smul.addr %s351, 8
        %s353 = scalar_lea.vmem [#allocation3], %s352
        %p354 = pneg %p64
        %p355 = pneg %p61
        %s356 = sand.u32 %s31, 1
        %s357 = scalar_lea.sflag [#allocation7], %s356
        %s358 = sand.u32 %s77, 1
        %s359 = smul.addr %s358, 8
        %s360 = scalar_lea.vmem [#allocation6], %s359
        %p361 = pneg %p90
        %p362 = pneg %p87
        %p363 = pneg %p111
        %p364 = pneg %p108
        %p365 = pneg %p132
        %p366 = pneg %p129
        %p367 = pneg %p158
        %p368 = pneg %p155
        %p369 = scmp.lt.s32.totalorder %s36, 0
        %s370 = scalar_select %p369, %s36, 0
        %s371 = scalar_lea.vmem %s5, %s370
        %p372 = pneg %p184
        %p373 = pneg %p181
        %p374 = pneg %p212
        %p375 = pneg %p209
        %s376 = sand.u32 %s199, 1
        %s377 = scalar_lea.sflag [#allocation5], %s376
        %s378 = sand.u32 %s199, 1
        %s379 = smul.addr %s378, 8
        %s380 = scalar_lea.vmem [#allocation9], %s379
        %p381 = pneg %p238
        %p382 = pneg %p235
        %s383 = sand.u32 %s225, 1
        %s384 = scalar_lea.sflag [#allocation11], %s383
        %s385 = sand.u32 %s225, 1
        %s386 = smul.addr %s385, 8
        %s387 = scalar_lea.vmem [#allocation10], %s386
        %p388 = scmp.lt.s32.totalorder %s36, 0
        %s389 = scalar_select %p388, %s36, 0
        %s390 = scalar_lea.vmem %s5, %s389
        %p392 = scmp.eq.s32.totalorder %s36, 0
        // Predicated region
        $region57: #{tpu_custom_call.1} parent=43 // pred_check
          %p393 = pneg %p392
        $region58: #{tpu_custom_call.1} parent=43 // pred_check_branch
          %395 = sbr.rel (%p393) target = $region60
        $region59: #{tpu_custom_call.1} parent=43 // pred_region
          %v396 = vld [vmem:[%s340] sm:$0xff]
          %v397 = vld [vmem:[%s331] sm:$0xff]
          %v398 = vadd.f32 %v396, %v397
          %399 = vadd.xlane.f32.xlu0 %v398
          %v400 = vpop.xlane.xlu0 %399
          %v401 = vrcp.pop 128.0
          %v402 = vmul.f32 %v400, %v401
          %v403 = vsub.f32 %v398, %v402
          %v404 = vmul.f32 %v403, %v403
          %405 = vadd.xlane.f32.xlu0 %v404
          %v406 = vpop.xlane.xlu0 %405
          %v407 = vmul.f32 %v406, %v401
          %v408 = vadd.f32 %v407, 1e-05
          %v409 = vrsqrt.pop %v408
          %v410 = vmul.f32 %v403, %v409
          %v411 = vld [vmem:[%s2] sm:$0x1]
          %v413 = vlaneseq
          %v414 = vshrl.u32 %v413, 7
          %v415 = vsub.s32 0, %v414
          %v416 = vrot.slane %v411, %v415
          %v418 = vmul.f32 %v410, %v416
          %v419 = vld [vmem:[%s3] sm:$0x1]
          %v421 = vlaneseq
          %v422 = vshrl.u32 %v421, 7
          %v423 = vsub.s32 0, %v422
          %v424 = vrot.slane %v419, %v423
          %v426 = vadd.f32 %v418, %v424
          %427 = vst [vmem:[#allocation2] sm:$0xff] %v426
          %428 = vst [vmem:[%s387] sm:$0xff] %v398
        $region60: #{tpu_custom_call.1} parent=43 // pred_fallthru
          _
        %v429 = vld [vmem:[#allocation2] sm:$0xff]
        %v430 = vpack.c.bf16 %v429, %v429
        %v431 = vld [vmem:[#allocation8] sm:$0xf]
        %v432 = vld [vmem:[#allocation8 + $0x4] sm:$0xf]
        %v433 = vld [vmem:[#allocation8 + $0x8] sm:$0xf]
        %v434 = vld [vmem:[#allocation8 + $0xc] sm:$0xf]
        %v435 = vld [vmem:[#allocation8 + $0x10] sm:$0xf]
        %v436 = vld [vmem:[#allocation8 + $0x14] sm:$0xf]
        %v437 = vld [vmem:[#allocation8 + $0x18] sm:$0xf]
        %v438 = vld [vmem:[#allocation8 + $0x1c] sm:$0xf]
        %v439 = vld [vmem:[#allocation8 + $0x20] sm:$0xf]
        %v440 = vld [vmem:[#allocation8 + $0x24] sm:$0xf]
        %v441 = vld [vmem:[#allocation8 + $0x28] sm:$0xf]
        %v442 = vld [vmem:[#allocation8 + $0x2c] sm:$0xf]
        %v443 = vld [vmem:[#allocation8 + $0x30] sm:$0xf]
        %v444 = vld [vmem:[#allocation8 + $0x34] sm:$0xf]
        %v445 = vld [vmem:[#allocation8 + $0x38] sm:$0xf]
        %v446 = vld [vmem:[#allocation8 + $0x3c] sm:$0xf]
        %v447 = vld [vmem:[%s390] sm:$0x1]
        %v449 = vlaneseq
        %v450 = vshrl.u32 %v449, 7
        %v451 = vsub.s32 0, %v450
        %v452 = vrot.slane %v447, %v451
        %v470 = vunpack.c.l.b16 %v431
        %v471 = vunpack.c.l.b16 %v432
        %v472 = vunpack.c.l.b16 %v433
        %v473 = vunpack.c.l.b16 %v434
        %v474 = vunpack.c.l.b16 %v435
        %v475 = vunpack.c.l.b16 %v436
        %v476 = vunpack.c.l.b16 %v437
        %v477 = vunpack.c.l.b16 %v438
        %v478 = vunpack.c.l.b16 %v439
        %v479 = vunpack.c.l.b16 %v440
        %v480 = vunpack.c.l.b16 %v441
        %v481 = vunpack.c.l.b16 %v442
        %v482 = vunpack.c.l.b16 %v443
        %v483 = vunpack.c.l.b16 %v444
        %v484 = vunpack.c.l.b16 %v445
        %v485 = vunpack.c.l.b16 %v446
        %v486 = vpack.c.b16 %v471, %v470
        %v487 = vpack.c.b16 %v473, %v472
        %v488 = vpack.c.b16 %v475, %v474
        %v489 = vpack.c.b16 %v477, %v476
        %v490 = vpack.c.b16 %v479, %v478
        %v491 = vpack.c.b16 %v481, %v480
        %v492 = vpack.c.b16 %v483, %v482
        %v493 = vpack.c.b16 %v485, %v484
        %502 = vmatprep.subr.bf16.mxu0 0
        %503 = vmatpush1.bf16.msra.mxu0 %v486
        %504 = vmatprep.subr.bf16.mxu0 0
        %505 = vmatpush1.bf16.msra.mxu0 %v487
        %506 = vmatprep.subr.bf16.mxu0 0
        %507 = vmatpush1.bf16.msra.mxu0 %v488
        %508 = vmatprep.subr.bf16.mxu0 0
        %509 = vmatpush1.bf16.msra.mxu0 %v489
        %510 = vmatprep.subr.bf16.mxu0 0
        %511 = vmatpush1.bf16.msra.mxu0 %v490
        %512 = vmatprep.subr.bf16.mxu0 0
        %513 = vmatpush1.bf16.msra.mxu0 %v491
        %514 = vmatprep.subr.bf16.mxu0 0
        %515 = vmatpush1.bf16.msra.mxu0 %v492
        %516 = vmatprep.subr.bf16.mxu0 0
        %517 = vmatpush1.bf16.msra.mxu0 %v493
        %518 = vmatprep.subr.bf16.mxu0 0
        %519 = vmatpush1.bf16.msra.mxu0 0
        %520 = vmatprep.subr.bf16.mxu0 0
        %521 = vmatpush1.bf16.msra.mxu0 0
        %522 = vmatprep.subr.bf16.mxu0 0
        %523 = vmatpush1.bf16.msra.mxu0 0
        %524 = vmatprep.subr.bf16.mxu0 0
        %525 = vmatpush1.bf16.msra.mxu0 0
        %526 = vmatprep.subr.bf16.mxu0 0
        %527 = vmatpush1.bf16.msra.mxu0 0
        %528 = vmatprep.subr.bf16.mxu0 0
        %529 = vmatpush1.bf16.msra.mxu0 0
        %530 = vmatprep.subr.bf16.mxu0 0
        %531 = vmatpush1.bf16.msra.mxu0 0
        %532 = vmatprep.subr.bf16.mxu0 0
        %533 = vmatpush1.bf16.msra.mxu0 0
        %534 = vmatprep.mubr.bf16.mxu0 0
        %535 = vmatmul.mubr.bf16.gmra.mrb[0].mxu0 %v430
        %v536 = vpop.f32.mrb[0].mxu0
        %v537 = vadd.f32 %v452, %v536
        %v538 = vpop.f32.mrb[0].mxu0
        %v539 = vpop.f32.mrb[0].mxu0
        %v540 = vpop.f32.mrb[0].mxu0
        %541 = vdwg.mxu0
        %542 = vst [vmem:[%s380] sm:$0xff] %v537
        %s543 = sand.u32 %s199, 1
        %s544 = scalar_lea.sflag [#allocation5], %s543
        %s545 = sand.u32 %s199, 1
        %s546 = smul.addr %s545, 8
        %s547 = scalar_lea.vmem [#allocation9], %s546
        %s548 = sand.u32 %s225, 1
        %s549 = scalar_lea.sflag [#allocation11], %s548
        %s550 = sand.u32 %s225, 1
        %s551 = smul.addr %s550, 8
        %s552 = scalar_lea.vmem [#allocation10], %s551
        // Predicated region
        $region61: #{tpu_custom_call.1} parent=43 // pred_check
          %p553 = pneg %p209
        $region62: #{tpu_custom_call.1} parent=43 // pred_check_branch
          %555 = sbr.rel (%p553) target = $region64
        $region63: #{tpu_custom_call.1} parent=43 // pred_region
          %s557 = ssub.s32 128, 128
          %558 = vsyncadd %s544, %s557
          %s559 = sadd.s32 %s36, %s35
          %s560 = smul.addr %s559, 128
          %s561 = scalar_lea.hbm %s6, %s560
          %s563 = sshll.u32 %s547, 4
          %s564 = int_to_ptr.vmem [resolvable:$true] %s563
          %566 = dma.vmem_to_hbm [thread:$0]  %s564, 128, %s561, %s544
        $region64: #{tpu_custom_call.1} parent=43 // pred_fallthru
          _
        // Predicated region
        $region65: #{tpu_custom_call.1} parent=43 // pred_check
          %p567 = pneg %p235
        $region66: #{tpu_custom_call.1} parent=43 // pred_check_branch
          %569 = sbr.rel (%p567) target = $region68
        $region67: #{tpu_custom_call.1} parent=43 // pred_region
          %s571 = ssub.s32 128, 128
          %572 = vsyncadd %s549, %s571
          %s573 = smul.addr %s35, 128
          %s574 = scalar_lea.hbm %s7, %s573
          %s576 = sshll.u32 %s552, 4
          %s577 = int_to_ptr.vmem [resolvable:$true] %s576
          %579 = dma.vmem_to_hbm [thread:$0]  %s577, 128, %s574, %s549
        $region68: #{tpu_custom_call.1} parent=43 // pred_fallthru
          _
      $region44: #{tpu_custom_call.1} parent=5 // pred_fallthru
        _
      %p580 = scmp.le.s32.totalorder 2, %s26
      // Predicated region
      $region69: #{tpu_custom_call.1} parent=5 // pred_check
        %p581 = pneg %p580
      $region70: #{tpu_custom_call.1} parent=5 // pred_check_branch
        %583 = sbr.rel (%p581) target = $region72
      $region71: #{tpu_custom_call.1} parent=5 // pred_region
        %s584 = ssub.s32 %s26, 2
        // Predicated region
        $region73: #{tpu_custom_call.1} parent=71 // pred_check
          %p585 = pneg %p215
        $region74: #{tpu_custom_call.1} parent=71 // pred_check_branch
          %587 = sbr.rel (%p585) target = $region76
        $region75: #{tpu_custom_call.1} parent=71 // pred_region
          %s588 = sand.u32 %s200, 1
          %s589 = scalar_lea.sflag [#allocation5], %s588
          %s590 = sand.u32 %s200, 1
          %s591 = smul.addr %s590, 8
          %s592 = scalar_lea.vmem [#allocation9], %s591
          %593 = dma.done %s589, 128
        $region76: #{tpu_custom_call.1} parent=71 // pred_fallthru
          _
        // Predicated region
        $region77: #{tpu_custom_call.1} parent=71 // pred_check
          %p594 = pneg %p241
        $region78: #{tpu_custom_call.1} parent=71 // pred_check_branch
          %596 = sbr.rel (%p594) target = $region80
        $region79: #{tpu_custom_call.1} parent=71 // pred_region
          %s597 = sand.u32 %s226, 1
          %s598 = scalar_lea.sflag [#allocation11], %s597
          %s599 = sand.u32 %s226, 1
          %s600 = smul.addr %s599, 8
          %s601 = scalar_lea.vmem [#allocation10], %s600
          %602 = dma.done %s598, 128
        $region80: #{tpu_custom_call.1} parent=71 // pred_fallthru
          _
      $region72: #{tpu_custom_call.1} parent=5 // pred_fallthru
        _
    $region6: #{tpu_custom_call.1} parent=1 // loop_footer
      %s30 = sadd.s32 1, %s26
    $region7: #{tpu_custom_call.1} parent=1 // loop_footer_branch
      %25 = sbr.rel target = $region3
    $region8: #{tpu_custom_call.1} parent=1 // loop_exit
      _
    %603 = vsyncpa [#allocation4], 1
    %s604 = scalar_lea.sflag [#allocation4], 1
    %605 = vsyncpa %s604, 1
    %606 = vsyncpa [#allocation7], 1
    %s607 = scalar_lea.sflag [#allocation7], 1
    %608 = vsyncpa %s607, 1
    %609 = vsyncpa [#allocation5], 1
    %s610 = scalar_lea.sflag [#allocation5], 1
    %611 = vsyncpa %s610, 1
    %612 = vsyncpa [#allocation11], 1
    %s613 = scalar_lea.sflag [#allocation11], 1
    %614 = vsyncpa %s613, 1

</llo_original>
